<compile_context>
chip_gen: v7x
topology: tpu7x:2x2x1
jax: 0.10.0
libtpu: 0.0.40
codegen_flags: <defaults>
</compile_context>

<pallas_src>
import jax
import jax.numpy as jnp
from jax.experimental import pallas as pl
from jax.experimental.pallas import tpu as pltpu

# ----- model dimensions -----
B, T, C = 2, 8, 4      # batch, window_size (seq len), input_channels
H = 32                 # hidden_size
L = 16                 # fc_hidden_sizes[0] (latent dim)
OUT_W = 128            # lane-dense packed output slab: [rec (T*C) | latent (L) | zeros]


def lstmae_kernel(x_ref,                                  # [bt, T*C] lane-dense input
                  wxe_big_ref, be_big_ref, whe_ref,       # encoder LSTM (block-diag x-proj, bias, hidden)
                  w1_ref, b1_ref,                         # encoder_fc: Linear(H->L) + Sigmoid
                  w2_ref, b2_ref,                         # decoder_fc: Linear(L->H) + ReLU
                  wxd_ref, whd_ref, bd_ref,               # decoder LSTM
                  wo_big_ref, bo_big_ref,                 # decoder_out_fc (block-diag, bias folded)
                  out_ref,                                 # [bt, OUT_W] packed rec|latent slab
                  h_scratch):                              # VMEM [bt, T*H]
    f32 = jnp.float32
    bf16 = jnp.bfloat16
    bt = x_ref.shape[0]

    def gate_act(gates, c):
        # PyTorch gate order: i, f, g, o. gates is exactly one 128-lane vreg wide,
        # so full-width sigmoid/tanh cost the same as 32-lane slices:
        # 3 serial EUP pushes per step (sigmoid, tanh, tanh(c_new)) instead of 6.
        sig = jax.nn.sigmoid(gates)
        th = jnp.tanh(gates)
        i = sig[:, 0 * H:1 * H]
        f = sig[:, 1 * H:2 * H]
        g = th[:, 2 * H:3 * H]
        o = sig[:, 3 * H:4 * H]
        c_new = f * c + i * g
        h_new = o * jnp.tanh(c_new)
        return h_new, c_new

    # ---------------- encoder LSTM (h0 = c0 = 0) ----------------
    # Hoisted input projection: ONE matmul for all timesteps, bias folded in.
    # xg[:, t*4H:(t+1)*4H] == x[:, t, :] @ W_ih^T + (b_ih + b_hh)
    xg = (jnp.dot(x_ref[...], wxe_big_ref[...], preferred_element_type=f32)
          + be_big_ref[...])                                      # [bt, T*4H]
    whe_bf = whe_ref[...].astype(bf16)   # bf16 only on the MXU operand (single-pass)
    h = jnp.zeros((bt, H), f32)
    c = jnp.zeros((bt, H), f32)
    for t in range(T):            # T small & static -> unrolled; only h@W_hh on the chain
        gates = xg[:, t * 4 * H:(t + 1) * 4 * H] + jnp.dot(
            h.astype(bf16), whe_bf, preferred_element_type=f32)
        h, c = gate_act(gates, c)

    # ---------------- encoder_fc: Linear + Sigmoid (latent_sigmoid=True) ----
    latent = jax.nn.sigmoid(
        jnp.dot(h, w1_ref[...], preferred_element_type=f32) + b1_ref[...])

    # ---------------- decoder_fc: Linear + ReLU ------------------
    dec_in = jnp.maximum(
        jnp.dot(latent, w2_ref[...], preferred_element_type=f32) + b2_ref[...],
        0.0)

    # ---------------- decoder LSTM ----------------
    # decoder_input.unsqueeze(1).repeat(1, T, 1): identical input every step
    # -> its gate projection is loop-invariant; compute it once (bias folded).
    xd_gates = (jnp.dot(dec_in, wxd_ref[...], preferred_element_type=f32)
                + bd_ref[...])                                    # [bt, 4H]
    whd_bf = whd_ref[...].astype(bf16)
    h2 = jnp.zeros((bt, H), f32)
    c2 = jnp.zeros((bt, H), f32)
    for t in range(T):
        gates = xd_gates + jnp.dot(h2.astype(bf16), whd_bf,
                                   preferred_element_type=f32)
        h2, c2 = gate_act(gates, c2)
        # Per-step VMEM scratch write (off the critical chain) instead of keeping
        # all T hidden states live -> caps vreg pressure at large batch tiles.
        h_scratch[:, t * H:(t + 1) * H] = h2

    # ------- decoder_out_fc: one block-diag matmul + ONE lane-dense 128-wide store -------
    rec = (jnp.dot(h_scratch[...], wo_big_ref[...], preferred_element_type=f32)
           + bo_big_ref[...])                                     # [bt, T*C]
    pad = jnp.zeros((bt, OUT_W - T * C - L), f32)
    out_ref[...] = jnp.concatenate([rec, latent, pad], axis=-1)   # [bt, 128] unmasked vst


def prepare_params(params):
    """Fold per-timestep projections into block-diagonal weights ONCE (init time),
    keeping the forward path free of kron/tile XLA ops."""
    (wxe, whe, be, w1, b1, w2, b2, wxd, whd, bd, wo, bo) = params
    eye_t = jnp.eye(T, dtype=jnp.float32)
    wxe_big = jnp.kron(eye_t, wxe)           # [T*C, T*4H], block-diag(wxe)
    be_big = jnp.tile(be, (1, T))            # [1, T*4H]
    wo_big = jnp.kron(eye_t, wo)             # [T*H, T*C], block-diag(wo)
    bo_big = jnp.tile(bo, (1, T))            # [1, T*C]
    return (wxe_big, be_big, whe, w1, b1, w2, b2, wxd, whd, bd, wo_big, bo_big)


def _pick_batch_tile(bx):
    # >= 8 rows (full f32 sublane), <= 256 rows (v6e/v7x MXU M-dim), and aim for
    # >= 2 grid steps when the batch allows so both v7x TensorCores get work.
    half = -(-bx // 2)                       # ceil(bx / 2)
    return max(8, min(256, -(-half // 8) * 8))


def lstmae_forward(x, prepared, *, batch_tile=None):
    """x: [B, T, C] float32. prepared = prepare_params(raw_params).
    Returns (reconstruction [B, T, C], latent [B, L])."""
    bx, tx, cx = x.shape
    bt = _pick_batch_tile(bx) if batch_tile is None else batch_tile
    n_tiles = -(-bx // bt)
    bp = n_tiles * bt                        # padded batch (zero rows sliced off below)

    x2 = x.reshape(bx, tx * cx)              # lane-dense input slab
    if bp != bx:
        x2 = jnp.pad(x2, ((0, bp - bx), (0, 0)))

    def wspec(w):
        # full-array block, constant index_map -> weight stays resident in VMEM
        # TODO(synk): pipeline_mode=pl.Buffered(1) for these constant blocks once
        # single-buffering is supported by the grid pipeline (minor VMEM trim).
        return pl.BlockSpec(w.shape, lambda i, _nd=w.ndim: (0,) * _nd)

    in_specs = [pl.BlockSpec((bt, tx * cx), lambda i: (i, 0))] + [wspec(w) for w in prepared]
    out_specs = pl.BlockSpec((bt, OUT_W), lambda i: (i, 0))

    slab = pl.pallas_call(
        lstmae_kernel,
        out_shape=jax.ShapeDtypeStruct((bp, OUT_W), jnp.float32),
        grid=(n_tiles,),
        in_specs=in_specs,
        out_specs=out_specs,
        scratch_shapes=[pltpu.VMEM((bt, tx * H), jnp.float32)],
        compiler_params=pltpu.CompilerParams(
            dimension_semantics=("parallel",),        # shard batch tiles across TCs (v7x)
            vmem_limit_bytes=32 * 1024 * 1024),       # safe on v5e/v6e/v7x; kernel uses <8 MiB
    )(x2, *prepared)

    rec = slab[:bx, :tx * cx].reshape(bx, tx, cx)
    lat = slab[:bx, tx * cx:tx * cx + L]
    return rec, lat


def init_params(key):
    """Deterministic synthetic parameters (PyTorch-equivalent shapes, pre-transposed)."""
    ks = jax.random.split(key, 13)
    s = 0.1
    # encoder LSTM: W_ih [4H, C] -> [C, 4H]; W_hh [4H, H] -> [H, 4H]; b = b_ih + b_hh -> [1, 4H]
    wxe = jax.random.normal(ks[0], (C, 4 * H), jnp.float32) * s
    whe = jax.random.normal(ks[1], (H, 4 * H), jnp.float32) * s
    be = jax.random.normal(ks[2], (1, 4 * H), jnp.float32) * s
    # encoder_fc Linear(H, L): weight [L, H] -> [H, L]
    w1 = jax.random.normal(ks[3], (H, L), jnp.float32) * s
    b1 = jax.random.normal(ks[4], (1, L), jnp.float32) * s
    # decoder_fc Linear(L, H): weight [H, L] -> [L, H]
    w2 = jax.random.normal(ks[5], (L, H), jnp.float32) * s
    b2 = jax.random.normal(ks[6], (1, H), jnp.float32) * s
    # decoder LSTM: input size H
    wxd = jax.random.normal(ks[7], (H, 4 * H), jnp.float32) * s
    whd = jax.random.normal(ks[8], (H, 4 * H), jnp.float32) * s
    bd = jax.random.normal(ks[9], (1, 4 * H), jnp.float32) * s
    # decoder_out_fc Linear(H, C): weight [C, H] -> [H, C]
    wo = jax.random.normal(ks[10], (H, C), jnp.float32) * s
    bo = jax.random.normal(ks[11], (1, C), jnp.float32) * s
    return (wxe, whe, be, w1, b1, w2, b2, wxd, whd, bd, wo, bo)


def reference_forward(x, params):
    """Pure-JAX float32 reference reproducing the PyTorch forward semantics."""
    (wxe, whe, be, w1, b1, w2, b2, wxd, whd, bd, wo, bo) = params
    bx = x.shape[0]

    def cell(x_t, h, c, wx, wh, b):
        g = x_t @ wx + h @ wh + b
        i = jax.nn.sigmoid(g[:, :H])
        f = jax.nn.sigmoid(g[:, H:2 * H])
        gg = jnp.tanh(g[:, 2 * H:3 * H])
        o = jax.nn.sigmoid(g[:, 3 * H:])
        c = f * c + i * gg
        return o * jnp.tanh(c), c

    h = jnp.zeros((bx, H))
    c = jnp.zeros((bx, H))
    for t in range(T):
        h, c = cell(x[:, t, :], h, c, wxe, whe, be)
    latent = jax.nn.sigmoid(h @ w1 + b1)
    dec_in = jnp.maximum(latent @ w2 + b2, 0.0)
    h2 = jnp.zeros((bx, H))
    c2 = jnp.zeros((bx, H))
    recs = []
    for t in range(T):
        h2, c2 = cell(dec_in, h2, c2, wxd, whd, bd)
        recs.append(h2 @ wo + bo)
    return jnp.stack(recs, axis=1), latent


if __name__ == "__main__":
    key = jax.random.PRNGKey(0)
    kx, kp = jax.random.split(key)
    x = jax.random.normal(kx, (B, T, C), jnp.float32)
    raw_params = init_params(kp)
    prepared = prepare_params(raw_params)    # kron/tile folding done ONCE, off the forward path

    rec, lat = jax.block_until_ready(lstmae_forward(x, prepared))

    # quiet correctness check against the pure-JAX f32 reference
    rec_ref, lat_ref = reference_forward(x, raw_params)
    assert rec.shape == (B, T, C) and lat.shape == (B, L)
    # bf16 MXU operands on the 16-step recurrence (f32 accumulation/state) leave
    # ~1e-3-level error vs the all-f32 reference; tolerance relaxed accordingly.
    assert jnp.allclose(rec, rec_ref, atol=2e-2, rtol=2e-2)
    assert jnp.allclose(lat, lat_ref, atol=2e-2, rtol=2e-2)

    print("KERNEL_OK")
</pallas_src>

<mosaic_0001>
module attributes {stable_mosaic.version = 11 : i64} {
  func.func @lstmae_kernel(%arg0: i32, %arg1: memref<8x32xf32, #tpu.memory_space<vmem>>, %arg2: memref<32x1024xf32, #tpu.memory_space<vmem>>, %arg3: memref<1x1024xf32, #tpu.memory_space<vmem>>, %arg4: memref<32x128xf32, #tpu.memory_space<vmem>>, %arg5: memref<32x16xf32, #tpu.memory_space<vmem>>, %arg6: memref<1x16xf32, #tpu.memory_space<vmem>>, %arg7: memref<16x32xf32, #tpu.memory_space<vmem>>, %arg8: memref<1x32xf32, #tpu.memory_space<vmem>>, %arg9: memref<32x128xf32, #tpu.memory_space<vmem>>, %arg10: memref<32x128xf32, #tpu.memory_space<vmem>>, %arg11: memref<1x128xf32, #tpu.memory_space<vmem>>, %arg12: memref<256x32xf32, #tpu.memory_space<vmem>>, %arg13: memref<1x32xf32, #tpu.memory_space<vmem>>, %arg14: memref<8x128xf32, #tpu.memory_space<vmem>>, %arg15: memref<8x256xf32, #tpu.memory_space<vmem>>) attributes {dimension_semantics = [#tpu.dimension_semantics<parallel>], iteration_bounds = array<i64: 1>, scalar_prefetch = 0 : i64, scratch_operands = 1 : i64, tpu.core_type = #tpu.core_type<tc>, window_params = [{transform_indices = @transform_0, window_bounds = array<i64: 8, 32>}, {pipeline_mode = #tpu.pipeline_mode<synchronous>, transform_indices = @transform_1, window_bounds = array<i64: 32, 1024>}, {pipeline_mode = #tpu.pipeline_mode<synchronous>, transform_indices = @transform_2, window_bounds = array<i64: 1, 1024>}, {pipeline_mode = #tpu.pipeline_mode<synchronous>, transform_indices = @transform_3, window_bounds = array<i64: 32, 128>}, {pipeline_mode = #tpu.pipeline_mode<synchronous>, transform_indices = @transform_4, window_bounds = array<i64: 32, 16>}, {pipeline_mode = #tpu.pipeline_mode<synchronous>, transform_indices = @transform_5, window_bounds = array<i64: 1, 16>}, {pipeline_mode = #tpu.pipeline_mode<synchronous>, transform_indices = @transform_6, window_bounds = array<i64: 16, 32>}, {pipeline_mode = #tpu.pipeline_mode<synchronous>, transform_indices = @transform_7, window_bounds = array<i64: 1, 32>}, {pipeline_mode = #tpu.pipeline_mode<synchronous>, transform_indices = @transform_8, window_bounds = array<i64: 32, 128>}, {pipeline_mode = #tpu.pipeline_mode<synchronous>, transform_indices = @transform_9, window_bounds = array<i64: 32, 128>}, {pipeline_mode = #tpu.pipeline_mode<synchronous>, transform_indices = @transform_10, window_bounds = array<i64: 1, 128>}, {pipeline_mode = #tpu.pipeline_mode<synchronous>, transform_indices = @transform_11, window_bounds = array<i64: 256, 32>}, {pipeline_mode = #tpu.pipeline_mode<synchronous>, transform_indices = @transform_12, window_bounds = array<i64: 1, 32>}, {transform_indices = @transform_13, window_bounds = array<i64: 8, 128>}]} {
    %c0 = arith.constant 0 : index
    %c0_0 = arith.constant 0 : index
    %0 = vector.load %arg1[%c0, %c0_0] : memref<8x32xf32, #tpu.memory_space<vmem>>, vector<8x32xf32>
    %c0_1 = arith.constant 0 : index
    %c0_2 = arith.constant 0 : index
    %1 = vector.load %arg2[%c0_1, %c0_2] : memref<32x1024xf32, #tpu.memory_space<vmem>>, vector<32x1024xf32>
    %cst = arith.constant dense<0.000000e+00> : vector<8x1024xf32>
    %2 = tpu.matmul %0, %1, %cst {dimension_numbers = #tpu.dot_dimension_numbers<[1], [0], [0], [1], [0, 0, 1, 1], [], []>} : vector<8x32xf32>, vector<32x1024xf32>, vector<8x1024xf32> -> vector<8x1024xf32>
    %c0_3 = arith.constant 0 : index
    %c0_4 = arith.constant 0 : index
    %3 = vector.load %arg3[%c0_3, %c0_4] : memref<1x1024xf32, #tpu.memory_space<vmem>>, vector<1x1024xf32>
    %4 = vector.broadcast %3 : vector<1x1024xf32> to vector<8x1024xf32>
    %5 = arith.addf %2, %4 : vector<8x1024xf32>
    %c0_5 = arith.constant 0 : index
    %c0_6 = arith.constant 0 : index
    %6 = vector.load %arg4[%c0_5, %c0_6] : memref<32x128xf32, #tpu.memory_space<vmem>>, vector<32x128xf32>
    %7 = arith.truncf %6 : vector<32x128xf32> to vector<32x128xbf16>
    %cst_7 = arith.constant 0.000000e+00 : f32
    %8 = vector.broadcast %cst_7 : f32 to vector<8x32xf32>
    %cst_8 = arith.constant 0.000000e+00 : f32
    %9 = vector.broadcast %cst_8 : f32 to vector<8x32xf32>
    %10 = vector.extract_strided_slice %5 {offsets = [0, 0], sizes = [8, 128], strides = [1, 1]} : vector<8x1024xf32> to vector<8x128xf32>
    %11 = arith.truncf %8 : vector<8x32xf32> to vector<8x32xbf16>
    %cst_9 = arith.constant dense<0.000000e+00> : vector<8x128xf32>
    %12 = tpu.matmul %11, %7, %cst_9 {dimension_numbers = #tpu.dot_dimension_numbers<[1], [0], [0], [1], [0, 0, 1, 1], [], []>} : vector<8x32xbf16>, vector<32x128xbf16>, vector<8x128xf32> -> vector<8x128xf32>
    %13 = arith.addf %10, %12 : vector<8x128xf32>
    %14 = arith.negf %13 : vector<8x128xf32>
    %15 = math.exp %14 : vector<8x128xf32>
    %cst_10 = arith.constant 1.000000e+00 : f32
    %16 = vector.broadcast %cst_10 : f32 to vector<8x128xf32>
    %17 = arith.addf %16, %15 : vector<8x128xf32>
    %18 = arith.divf %16, %17 : vector<8x128xf32>
    %19 = math.tanh %13 : vector<8x128xf32>
    %20 = vector.extract_strided_slice %18 {offsets = [0, 0], sizes = [8, 32], strides = [1, 1]} : vector<8x128xf32> to vector<8x32xf32>
    %21 = vector.extract_strided_slice %18 {offsets = [0, 32], sizes = [8, 32], strides = [1, 1]} : vector<8x128xf32> to vector<8x32xf32>
    %22 = vector.extract_strided_slice %19 {offsets = [0, 64], sizes = [8, 32], strides = [1, 1]} : vector<8x128xf32> to vector<8x32xf32>
    %23 = vector.extract_strided_slice %18 {offsets = [0, 96], sizes = [8, 32], strides = [1, 1]} : vector<8x128xf32> to vector<8x32xf32>
    %24 = arith.mulf %21, %9 : vector<8x32xf32>
    %25 = arith.mulf %20, %22 : vector<8x32xf32>
    %26 = arith.addf %24, %25 : vector<8x32xf32>
    %27 = math.tanh %26 : vector<8x32xf32>
    %28 = arith.mulf %23, %27 : vector<8x32xf32>
    %29 = vector.extract_strided_slice %5 {offsets = [0, 128], sizes = [8, 128], strides = [1, 1]} : vector<8x1024xf32> to vector<8x128xf32>
    %30 = arith.truncf %28 : vector<8x32xf32> to vector<8x32xbf16>
    %cst_11 = arith.constant dense<0.000000e+00> : vector<8x128xf32>
    %31 = tpu.matmul %30, %7, %cst_11 {dimension_numbers = #tpu.dot_dimension_numbers<[1], [0], [0], [1], [0, 0, 1, 1], [], []>} : vector<8x32xbf16>, vector<32x128xbf16>, vector<8x128xf32> -> vector<8x128xf32>
    %32 = arith.addf %29, %31 : vector<8x128xf32>
    %33 = arith.negf %32 : vector<8x128xf32>
    %34 = math.exp %33 : vector<8x128xf32>
    %cst_12 = arith.constant 1.000000e+00 : f32
    %35 = vector.broadcast %cst_12 : f32 to vector<8x128xf32>
    %36 = arith.addf %35, %34 : vector<8x128xf32>
    %37 = arith.divf %35, %36 : vector<8x128xf32>
    %38 = math.tanh %32 : vector<8x128xf32>
    %39 = vector.extract_strided_slice %37 {offsets = [0, 0], sizes = [8, 32], strides = [1, 1]} : vector<8x128xf32> to vector<8x32xf32>
    %40 = vector.extract_strided_slice %37 {offsets = [0, 32], sizes = [8, 32], strides = [1, 1]} : vector<8x128xf32> to vector<8x32xf32>
    %41 = vector.extract_strided_slice %38 {offsets = [0, 64], sizes = [8, 32], strides = [1, 1]} : vector<8x128xf32> to vector<8x32xf32>
    %42 = vector.extract_strided_slice %37 {offsets = [0, 96], sizes = [8, 32], strides = [1, 1]} : vector<8x128xf32> to vector<8x32xf32>
    %43 = arith.mulf %40, %26 : vector<8x32xf32>
    %44 = arith.mulf %39, %41 : vector<8x32xf32>
    %45 = arith.addf %43, %44 : vector<8x32xf32>
    %46 = math.tanh %45 : vector<8x32xf32>
    %47 = arith.mulf %42, %46 : vector<8x32xf32>
    %48 = vector.extract_strided_slice %5 {offsets = [0, 256], sizes = [8, 128], strides = [1, 1]} : vector<8x1024xf32> to vector<8x128xf32>
    %49 = arith.truncf %47 : vector<8x32xf32> to vector<8x32xbf16>
    %cst_13 = arith.constant dense<0.000000e+00> : vector<8x128xf32>
    %50 = tpu.matmul %49, %7, %cst_13 {dimension_numbers = #tpu.dot_dimension_numbers<[1], [0], [0], [1], [0, 0, 1, 1], [], []>} : vector<8x32xbf16>, vector<32x128xbf16>, vector<8x128xf32> -> vector<8x128xf32>
    %51 = arith.addf %48, %50 : vector<8x128xf32>
    %52 = arith.negf %51 : vector<8x128xf32>
    %53 = math.exp %52 : vector<8x128xf32>
    %cst_14 = arith.constant 1.000000e+00 : f32
    %54 = vector.broadcast %cst_14 : f32 to vector<8x128xf32>
    %55 = arith.addf %54, %53 : vector<8x128xf32>
    %56 = arith.divf %54, %55 : vector<8x128xf32>
    %57 = math.tanh %51 : vector<8x128xf32>
    %58 = vector.extract_strided_slice %56 {offsets = [0, 0], sizes = [8, 32], strides = [1, 1]} : vector<8x128xf32> to vector<8x32xf32>
    %59 = vector.extract_strided_slice %56 {offsets = [0, 32], sizes = [8, 32], strides = [1, 1]} : vector<8x128xf32> to vector<8x32xf32>
    %60 = vector.extract_strided_slice %57 {offsets = [0, 64], sizes = [8, 32], strides = [1, 1]} : vector<8x128xf32> to vector<8x32xf32>
    %61 = vector.extract_strided_slice %56 {offsets = [0, 96], sizes = [8, 32], strides = [1, 1]} : vector<8x128xf32> to vector<8x32xf32>
    %62 = arith.mulf %59, %45 : vector<8x32xf32>
    %63 = arith.mulf %58, %60 : vector<8x32xf32>
    %64 = arith.addf %62, %63 : vector<8x32xf32>
    %65 = math.tanh %64 : vector<8x32xf32>
    %66 = arith.mulf %61, %65 : vector<8x32xf32>
    %67 = vector.extract_strided_slice %5 {offsets = [0, 384], sizes = [8, 128], strides = [1, 1]} : vector<8x1024xf32> to vector<8x128xf32>
    %68 = arith.truncf %66 : vector<8x32xf32> to vector<8x32xbf16>
    %cst_15 = arith.constant dense<0.000000e+00> : vector<8x128xf32>
    %69 = tpu.matmul %68, %7, %cst_15 {dimension_numbers = #tpu.dot_dimension_numbers<[1], [0], [0], [1], [0, 0, 1, 1], [], []>} : vector<8x32xbf16>, vector<32x128xbf16>, vector<8x128xf32> -> vector<8x128xf32>
    %70 = arith.addf %67, %69 : vector<8x128xf32>
    %71 = arith.negf %70 : vector<8x128xf32>
    %72 = math.exp %71 : vector<8x128xf32>
    %cst_16 = arith.constant 1.000000e+00 : f32
    %73 = vector.broadcast %cst_16 : f32 to vector<8x128xf32>
    %74 = arith.addf %73, %72 : vector<8x128xf32>
    %75 = arith.divf %73, %74 : vector<8x128xf32>
    %76 = math.tanh %70 : vector<8x128xf32>
    %77 = vector.extract_strided_slice %75 {offsets = [0, 0], sizes = [8, 32], strides = [1, 1]} : vector<8x128xf32> to vector<8x32xf32>
    %78 = vector.extract_strided_slice %75 {offsets = [0, 32], sizes = [8, 32], strides = [1, 1]} : vector<8x128xf32> to vector<8x32xf32>
    %79 = vector.extract_strided_slice %76 {offsets = [0, 64], sizes = [8, 32], strides = [1, 1]} : vector<8x128xf32> to vector<8x32xf32>
    %80 = vector.extract_strided_slice %75 {offsets = [0, 96], sizes = [8, 32], strides = [1, 1]} : vector<8x128xf32> to vector<8x32xf32>
    %81 = arith.mulf %78, %64 : vector<8x32xf32>
    %82 = arith.mulf %77, %79 : vector<8x32xf32>
    %83 = arith.addf %81, %82 : vector<8x32xf32>
    %84 = math.tanh %83 : vector<8x32xf32>
    %85 = arith.mulf %80, %84 : vector<8x32xf32>
    %86 = vector.extract_strided_slice %5 {offsets = [0, 512], sizes = [8, 128], strides = [1, 1]} : vector<8x1024xf32> to vector<8x128xf32>
    %87 = arith.truncf %85 : vector<8x32xf32> to vector<8x32xbf16>
    %cst_17 = arith.constant dense<0.000000e+00> : vector<8x128xf32>
    %88 = tpu.matmul %87, %7, %cst_17 {dimension_numbers = #tpu.dot_dimension_numbers<[1], [0], [0], [1], [0, 0, 1, 1], [], []>} : vector<8x32xbf16>, vector<32x128xbf16>, vector<8x128xf32> -> vector<8x128xf32>
    %89 = arith.addf %86, %88 : vector<8x128xf32>
    %90 = arith.negf %89 : vector<8x128xf32>
    %91 = math.exp %90 : vector<8x128xf32>
    %cst_18 = arith.constant 1.000000e+00 : f32
    %92 = vector.broadcast %cst_18 : f32 to vector<8x128xf32>
    %93 = arith.addf %92, %91 : vector<8x128xf32>
    %94 = arith.divf %92, %93 : vector<8x128xf32>
    %95 = math.tanh %89 : vector<8x128xf32>
    %96 = vector.extract_strided_slice %94 {offsets = [0, 0], sizes = [8, 32], strides = [1, 1]} : vector<8x128xf32> to vector<8x32xf32>
    %97 = vector.extract_strided_slice %94 {offsets = [0, 32], sizes = [8, 32], strides = [1, 1]} : vector<8x128xf32> to vector<8x32xf32>
    %98 = vector.extract_strided_slice %95 {offsets = [0, 64], sizes = [8, 32], strides = [1, 1]} : vector<8x128xf32> to vector<8x32xf32>
    %99 = vector.extract_strided_slice %94 {offsets = [0, 96], sizes = [8, 32], strides = [1, 1]} : vector<8x128xf32> to vector<8x32xf32>
    %100 = arith.mulf %97, %83 : vector<8x32xf32>
    %101 = arith.mulf %96, %98 : vector<8x32xf32>
    %102 = arith.addf %100, %101 : vector<8x32xf32>
    %103 = math.tanh %102 : vector<8x32xf32>
    %104 = arith.mulf %99, %103 : vector<8x32xf32>
    %105 = vector.extract_strided_slice %5 {offsets = [0, 640], sizes = [8, 128], strides = [1, 1]} : vector<8x1024xf32> to vector<8x128xf32>
    %106 = arith.truncf %104 : vector<8x32xf32> to vector<8x32xbf16>
    %cst_19 = arith.constant dense<0.000000e+00> : vector<8x128xf32>
    %107 = tpu.matmul %106, %7, %cst_19 {dimension_numbers = #tpu.dot_dimension_numbers<[1], [0], [0], [1], [0, 0, 1, 1], [], []>} : vector<8x32xbf16>, vector<32x128xbf16>, vector<8x128xf32> -> vector<8x128xf32>
    %108 = arith.addf %105, %107 : vector<8x128xf32>
    %109 = arith.negf %108 : vector<8x128xf32>
    %110 = math.exp %109 : vector<8x128xf32>
    %cst_20 = arith.constant 1.000000e+00 : f32
    %111 = vector.broadcast %cst_20 : f32 to vector<8x128xf32>
    %112 = arith.addf %111, %110 : vector<8x128xf32>
    %113 = arith.divf %111, %112 : vector<8x128xf32>
    %114 = math.tanh %108 : vector<8x128xf32>
    %115 = vector.extract_strided_slice %113 {offsets = [0, 0], sizes = [8, 32], strides = [1, 1]} : vector<8x128xf32> to vector<8x32xf32>
    %116 = vector.extract_strided_slice %113 {offsets = [0, 32], sizes = [8, 32], strides = [1, 1]} : vector<8x128xf32> to vector<8x32xf32>
    %117 = vector.extract_strided_slice %114 {offsets = [0, 64], sizes = [8, 32], strides = [1, 1]} : vector<8x128xf32> to vector<8x32xf32>
    %118 = vector.extract_strided_slice %113 {offsets = [0, 96], sizes = [8, 32], strides = [1, 1]} : vector<8x128xf32> to vector<8x32xf32>
    %119 = arith.mulf %116, %102 : vector<8x32xf32>
    %120 = arith.mulf %115, %117 : vector<8x32xf32>
    %121 = arith.addf %119, %120 : vector<8x32xf32>
    %122 = math.tanh %121 : vector<8x32xf32>
    %123 = arith.mulf %118, %122 : vector<8x32xf32>
    %124 = vector.extract_strided_slice %5 {offsets = [0, 768], sizes = [8, 128], strides = [1, 1]} : vector<8x1024xf32> to vector<8x128xf32>
    %125 = arith.truncf %123 : vector<8x32xf32> to vector<8x32xbf16>
    %cst_21 = arith.constant dense<0.000000e+00> : vector<8x128xf32>
    %126 = tpu.matmul %125, %7, %cst_21 {dimension_numbers = #tpu.dot_dimension_numbers<[1], [0], [0], [1], [0, 0, 1, 1], [], []>} : vector<8x32xbf16>, vector<32x128xbf16>, vector<8x128xf32> -> vector<8x128xf32>
    %127 = arith.addf %124, %126 : vector<8x128xf32>
    %128 = arith.negf %127 : vector<8x128xf32>
    %129 = math.exp %128 : vector<8x128xf32>
    %cst_22 = arith.constant 1.000000e+00 : f32
    %130 = vector.broadcast %cst_22 : f32 to vector<8x128xf32>
    %131 = arith.addf %130, %129 : vector<8x128xf32>
    %132 = arith.divf %130, %131 : vector<8x128xf32>
    %133 = math.tanh %127 : vector<8x128xf32>
    %134 = vector.extract_strided_slice %132 {offsets = [0, 0], sizes = [8, 32], strides = [1, 1]} : vector<8x128xf32> to vector<8x32xf32>
    %135 = vector.extract_strided_slice %132 {offsets = [0, 32], sizes = [8, 32], strides = [1, 1]} : vector<8x128xf32> to vector<8x32xf32>
    %136 = vector.extract_strided_slice %133 {offsets = [0, 64], sizes = [8, 32], strides = [1, 1]} : vector<8x128xf32> to vector<8x32xf32>
    %137 = vector.extract_strided_slice %132 {offsets = [0, 96], sizes = [8, 32], strides = [1, 1]} : vector<8x128xf32> to vector<8x32xf32>
    %138 = arith.mulf %135, %121 : vector<8x32xf32>
    %139 = arith.mulf %134, %136 : vector<8x32xf32>
    %140 = arith.addf %138, %139 : vector<8x32xf32>
    %141 = math.tanh %140 : vector<8x32xf32>
    %142 = arith.mulf %137, %141 : vector<8x32xf32>
    %143 = vector.extract_strided_slice %5 {offsets = [0, 896], sizes = [8, 128], strides = [1, 1]} : vector<8x1024xf32> to vector<8x128xf32>
    %144 = arith.truncf %142 : vector<8x32xf32> to vector<8x32xbf16>
    %cst_23 = arith.constant dense<0.000000e+00> : vector<8x128xf32>
    %145 = tpu.matmul %144, %7, %cst_23 {dimension_numbers = #tpu.dot_dimension_numbers<[1], [0], [0], [1], [0, 0, 1, 1], [], []>} : vector<8x32xbf16>, vector<32x128xbf16>, vector<8x128xf32> -> vector<8x128xf32>
    %146 = arith.addf %143, %145 : vector<8x128xf32>
    %147 = arith.negf %146 : vector<8x128xf32>
    %148 = math.exp %147 : vector<8x128xf32>
    %cst_24 = arith.constant 1.000000e+00 : f32
    %149 = vector.broadcast %cst_24 : f32 to vector<8x128xf32>
    %150 = arith.addf %149, %148 : vector<8x128xf32>
    %151 = arith.divf %149, %150 : vector<8x128xf32>
    %152 = math.tanh %146 : vector<8x128xf32>
    %153 = vector.extract_strided_slice %151 {offsets = [0, 0], sizes = [8, 32], strides = [1, 1]} : vector<8x128xf32> to vector<8x32xf32>
    %154 = vector.extract_strided_slice %151 {offsets = [0, 32], sizes = [8, 32], strides = [1, 1]} : vector<8x128xf32> to vector<8x32xf32>
    %155 = vector.extract_strided_slice %152 {offsets = [0, 64], sizes = [8, 32], strides = [1, 1]} : vector<8x128xf32> to vector<8x32xf32>
    %156 = vector.extract_strided_slice %151 {offsets = [0, 96], sizes = [8, 32], strides = [1, 1]} : vector<8x128xf32> to vector<8x32xf32>
    %157 = arith.mulf %154, %140 : vector<8x32xf32>
    %158 = arith.mulf %153, %155 : vector<8x32xf32>
    %159 = arith.addf %157, %158 : vector<8x32xf32>
    %160 = math.tanh %159 : vector<8x32xf32>
    %161 = arith.mulf %156, %160 : vector<8x32xf32>
    %c0_25 = arith.constant 0 : index
    %c0_26 = arith.constant 0 : index
    %162 = vector.load %arg5[%c0_25, %c0_26] : memref<32x16xf32, #tpu.memory_space<vmem>>, vector<32x16xf32>
    %cst_27 = arith.constant dense<0.000000e+00> : vector<8x16xf32>
    %163 = tpu.matmul %161, %162, %cst_27 {dimension_numbers = #tpu.dot_dimension_numbers<[1], [0], [0], [1], [0, 0, 1, 1], [], []>} : vector<8x32xf32>, vector<32x16xf32>, vector<8x16xf32> -> vector<8x16xf32>
    %c0_28 = arith.constant 0 : index
    %c0_29 = arith.constant 0 : index
    %164 = vector.load %arg6[%c0_28, %c0_29] : memref<1x16xf32, #tpu.memory_space<vmem>>, vector<1x16xf32>
    %165 = vector.broadcast %164 : vector<1x16xf32> to vector<8x16xf32>
    %166 = arith.addf %163, %165 : vector<8x16xf32>
    %167 = arith.negf %166 : vector<8x16xf32>
    %168 = math.exp %167 : vector<8x16xf32>
    %cst_30 = arith.constant 1.000000e+00 : f32
    %169 = vector.broadcast %cst_30 : f32 to vector<8x16xf32>
    %170 = arith.addf %169, %168 : vector<8x16xf32>
    %171 = arith.divf %169, %170 : vector<8x16xf32>
    %c0_31 = arith.constant 0 : index
    %c0_32 = arith.constant 0 : index
    %172 = vector.load %arg7[%c0_31, %c0_32] : memref<16x32xf32, #tpu.memory_space<vmem>>, vector<16x32xf32>
    %cst_33 = arith.constant dense<0.000000e+00> : vector<8x32xf32>
    %173 = tpu.matmul %171, %172, %cst_33 {dimension_numbers = #tpu.dot_dimension_numbers<[1], [0], [0], [1], [0, 0, 1, 1], [], []>} : vector<8x16xf32>, vector<16x32xf32>, vector<8x32xf32> -> vector<8x32xf32>
    %c0_34 = arith.constant 0 : index
    %c0_35 = arith.constant 0 : index
    %174 = vector.load %arg8[%c0_34, %c0_35] : memref<1x32xf32, #tpu.memory_space<vmem>>, vector<1x32xf32>
    %175 = vector.broadcast %174 : vector<1x32xf32> to vector<8x32xf32>
    %176 = arith.addf %173, %175 : vector<8x32xf32>
    %cst_36 = arith.constant 0.000000e+00 : f32
    %177 = vector.broadcast %cst_36 : f32 to vector<8x32xf32>
    %178 = arith.maximumf %176, %177 : vector<8x32xf32>
    %c0_37 = arith.constant 0 : index
    %c0_38 = arith.constant 0 : index
    %179 = vector.load %arg9[%c0_37, %c0_38] : memref<32x128xf32, #tpu.memory_space<vmem>>, vector<32x128xf32>
    %cst_39 = arith.constant dense<0.000000e+00> : vector<8x128xf32>
    %180 = tpu.matmul %178, %179, %cst_39 {dimension_numbers = #tpu.dot_dimension_numbers<[1], [0], [0], [1], [0, 0, 1, 1], [], []>} : vector<8x32xf32>, vector<32x128xf32>, vector<8x128xf32> -> vector<8x128xf32>
    %c0_40 = arith.constant 0 : index
    %c0_41 = arith.constant 0 : index
    %181 = vector.load %arg11[%c0_40, %c0_41] : memref<1x128xf32, #tpu.memory_space<vmem>>, vector<1x128xf32>
    %182 = vector.broadcast %181 : vector<1x128xf32> to vector<8x128xf32>
    %183 = arith.addf %180, %182 : vector<8x128xf32>
    %c0_42 = arith.constant 0 : index
    %c0_43 = arith.constant 0 : index
    %184 = vector.load %arg10[%c0_42, %c0_43] : memref<32x128xf32, #tpu.memory_space<vmem>>, vector<32x128xf32>
    %185 = arith.truncf %184 : vector<32x128xf32> to vector<32x128xbf16>
    %cst_44 = arith.constant 0.000000e+00 : f32
    %186 = vector.broadcast %cst_44 : f32 to vector<8x32xf32>
    %cst_45 = arith.constant 0.000000e+00 : f32
    %187 = vector.broadcast %cst_45 : f32 to vector<8x32xf32>
    %188 = arith.truncf %186 : vector<8x32xf32> to vector<8x32xbf16>
    %cst_46 = arith.constant dense<0.000000e+00> : vector<8x128xf32>
    %189 = tpu.matmul %188, %185, %cst_46 {dimension_numbers = #tpu.dot_dimension_numbers<[1], [0], [0], [1], [0, 0, 1, 1], [], []>} : vector<8x32xbf16>, vector<32x128xbf16>, vector<8x128xf32> -> vector<8x128xf32>
    %190 = arith.addf %183, %189 : vector<8x128xf32>
    %191 = arith.negf %190 : vector<8x128xf32>
    %192 = math.exp %191 : vector<8x128xf32>
    %cst_47 = arith.constant 1.000000e+00 : f32
    %193 = vector.broadcast %cst_47 : f32 to vector<8x128xf32>
    %194 = arith.addf %193, %192 : vector<8x128xf32>
    %195 = arith.divf %193, %194 : vector<8x128xf32>
    %196 = math.tanh %190 : vector<8x128xf32>
    %197 = vector.extract_strided_slice %195 {offsets = [0, 0], sizes = [8, 32], strides = [1, 1]} : vector<8x128xf32> to vector<8x32xf32>
    %198 = vector.extract_strided_slice %195 {offsets = [0, 32], sizes = [8, 32], strides = [1, 1]} : vector<8x128xf32> to vector<8x32xf32>
    %199 = vector.extract_strided_slice %196 {offsets = [0, 64], sizes = [8, 32], strides = [1, 1]} : vector<8x128xf32> to vector<8x32xf32>
    %200 = vector.extract_strided_slice %195 {offsets = [0, 96], sizes = [8, 32], strides = [1, 1]} : vector<8x128xf32> to vector<8x32xf32>
    %201 = arith.mulf %198, %187 : vector<8x32xf32>
    %202 = arith.mulf %197, %199 : vector<8x32xf32>
    %203 = arith.addf %201, %202 : vector<8x32xf32>
    %204 = math.tanh %203 : vector<8x32xf32>
    %205 = arith.mulf %200, %204 : vector<8x32xf32>
    %c0_48 = arith.constant 0 : index
    %c0_49 = arith.constant 0 : index
    %206 = vector.load %arg15[%c0_48, %c0_49] : memref<8x256xf32, #tpu.memory_space<vmem>>, vector<8x32xf32>
    tpu.vector_store %arg15[%c0_48, %c0_49], %205 {strides = array<i32>} : memref<8x256xf32, #tpu.memory_space<vmem>>, vector<8x32xf32>,
    %207 = arith.truncf %205 : vector<8x32xf32> to vector<8x32xbf16>
    %cst_50 = arith.constant dense<0.000000e+00> : vector<8x128xf32>
    %208 = tpu.matmul %207, %185, %cst_50 {dimension_numbers = #tpu.dot_dimension_numbers<[1], [0], [0], [1], [0, 0, 1, 1], [], []>} : vector<8x32xbf16>, vector<32x128xbf16>, vector<8x128xf32> -> vector<8x128xf32>
    %209 = arith.addf %183, %208 : vector<8x128xf32>
    %210 = arith.negf %209 : vector<8x128xf32>
    %211 = math.exp %210 : vector<8x128xf32>
    %cst_51 = arith.constant 1.000000e+00 : f32
    %212 = vector.broadcast %cst_51 : f32 to vector<8x128xf32>
    %213 = arith.addf %212, %211 : vector<8x128xf32>
    %214 = arith.divf %212, %213 : vector<8x128xf32>
    %215 = math.tanh %209 : vector<8x128xf32>
    %216 = vector.extract_strided_slice %214 {offsets = [0, 0], sizes = [8, 32], strides = [1, 1]} : vector<8x128xf32> to vector<8x32xf32>
    %217 = vector.extract_strided_slice %214 {offsets = [0, 32], sizes = [8, 32], strides = [1, 1]} : vector<8x128xf32> to vector<8x32xf32>
    %218 = vector.extract_strided_slice %215 {offsets = [0, 64], sizes = [8, 32], strides = [1, 1]} : vector<8x128xf32> to vector<8x32xf32>
    %219 = vector.extract_strided_slice %214 {offsets = [0, 96], sizes = [8, 32], strides = [1, 1]} : vector<8x128xf32> to vector<8x32xf32>
    %220 = arith.mulf %217, %203 : vector<8x32xf32>
    %221 = arith.mulf %216, %218 : vector<8x32xf32>
    %222 = arith.addf %220, %221 : vector<8x32xf32>
    %223 = math.tanh %222 : vector<8x32xf32>
    %224 = arith.mulf %219, %223 : vector<8x32xf32>
    %c0_52 = arith.constant 0 : index
    %c32 = arith.constant 32 : index
    %225 = vector.load %arg15[%c0_52, %c32] : memref<8x256xf32, #tpu.memory_space<vmem>>, vector<8x32xf32>
    tpu.vector_store %arg15[%c0_52, %c32], %224 {strides = array<i32>} : memref<8x256xf32, #tpu.memory_space<vmem>>, vector<8x32xf32>,
    %226 = arith.truncf %224 : vector<8x32xf32> to vector<8x32xbf16>
    %cst_53 = arith.constant dense<0.000000e+00> : vector<8x128xf32>
    %227 = tpu.matmul %226, %185, %cst_53 {dimension_numbers = #tpu.dot_dimension_numbers<[1], [0], [0], [1], [0, 0, 1, 1], [], []>} : vector<8x32xbf16>, vector<32x128xbf16>, vector<8x128xf32> -> vector<8x128xf32>
    %228 = arith.addf %183, %227 : vector<8x128xf32>
    %229 = arith.negf %228 : vector<8x128xf32>
    %230 = math.exp %229 : vector<8x128xf32>
    %cst_54 = arith.constant 1.000000e+00 : f32
    %231 = vector.broadcast %cst_54 : f32 to vector<8x128xf32>
    %232 = arith.addf %231, %230 : vector<8x128xf32>
    %233 = arith.divf %231, %232 : vector<8x128xf32>
    %234 = math.tanh %228 : vector<8x128xf32>
    %235 = vector.extract_strided_slice %233 {offsets = [0, 0], sizes = [8, 32], strides = [1, 1]} : vector<8x128xf32> to vector<8x32xf32>
    %236 = vector.extract_strided_slice %233 {offsets = [0, 32], sizes = [8, 32], strides = [1, 1]} : vector<8x128xf32> to vector<8x32xf32>
    %237 = vector.extract_strided_slice %234 {offsets = [0, 64], sizes = [8, 32], strides = [1, 1]} : vector<8x128xf32> to vector<8x32xf32>
    %238 = vector.extract_strided_slice %233 {offsets = [0, 96], sizes = [8, 32], strides = [1, 1]} : vector<8x128xf32> to vector<8x32xf32>
    %239 = arith.mulf %236, %222 : vector<8x32xf32>
    %240 = arith.mulf %235, %237 : vector<8x32xf32>
    %241 = arith.addf %239, %240 : vector<8x32xf32>
    %242 = math.tanh %241 : vector<8x32xf32>
    %243 = arith.mulf %238, %242 : vector<8x32xf32>
    %c0_55 = arith.constant 0 : index
    %c64 = arith.constant 64 : index
    %244 = vector.load %arg15[%c0_55, %c64] : memref<8x256xf32, #tpu.memory_space<vmem>>, vector<8x32xf32>
    tpu.vector_store %arg15[%c0_55, %c64], %243 {strides = array<i32>} : memref<8x256xf32, #tpu.memory_space<vmem>>, vector<8x32xf32>,
    %245 = arith.truncf %243 : vector<8x32xf32> to vector<8x32xbf16>
    %cst_56 = arith.constant dense<0.000000e+00> : vector<8x128xf32>
    %246 = tpu.matmul %245, %185, %cst_56 {dimension_numbers = #tpu.dot_dimension_numbers<[1], [0], [0], [1], [0, 0, 1, 1], [], []>} : vector<8x32xbf16>, vector<32x128xbf16>, vector<8x128xf32> -> vector<8x128xf32>
    %247 = arith.addf %183, %246 : vector<8x128xf32>
    %248 = arith.negf %247 : vector<8x128xf32>
    %249 = math.exp %248 : vector<8x128xf32>
    %cst_57 = arith.constant 1.000000e+00 : f32
    %250 = vector.broadcast %cst_57 : f32 to vector<8x128xf32>
    %251 = arith.addf %250, %249 : vector<8x128xf32>
    %252 = arith.divf %250, %251 : vector<8x128xf32>
    %253 = math.tanh %247 : vector<8x128xf32>
    %254 = vector.extract_strided_slice %252 {offsets = [0, 0], sizes = [8, 32], strides = [1, 1]} : vector<8x128xf32> to vector<8x32xf32>
    %255 = vector.extract_strided_slice %252 {offsets = [0, 32], sizes = [8, 32], strides = [1, 1]} : vector<8x128xf32> to vector<8x32xf32>
    %256 = vector.extract_strided_slice %253 {offsets = [0, 64], sizes = [8, 32], strides = [1, 1]} : vector<8x128xf32> to vector<8x32xf32>
    %257 = vector.extract_strided_slice %252 {offsets = [0, 96], sizes = [8, 32], strides = [1, 1]} : vector<8x128xf32> to vector<8x32xf32>
    %258 = arith.mulf %255, %241 : vector<8x32xf32>
    %259 = arith.mulf %254, %256 : vector<8x32xf32>
    %260 = arith.addf %258, %259 : vector<8x32xf32>
    %261 = math.tanh %260 : vector<8x32xf32>
    %262 = arith.mulf %257, %261 : vector<8x32xf32>
    %c0_58 = arith.constant 0 : index
    %c96 = arith.constant 96 : index
    %263 = vector.load %arg15[%c0_58, %c96] : memref<8x256xf32, #tpu.memory_space<vmem>>, vector<8x32xf32>
    tpu.vector_store %arg15[%c0_58, %c96], %262 {strides = array<i32>} : memref<8x256xf32, #tpu.memory_space<vmem>>, vector<8x32xf32>,
    %264 = arith.truncf %262 : vector<8x32xf32> to vector<8x32xbf16>
    %cst_59 = arith.constant dense<0.000000e+00> : vector<8x128xf32>
    %265 = tpu.matmul %264, %185, %cst_59 {dimension_numbers = #tpu.dot_dimension_numbers<[1], [0], [0], [1], [0, 0, 1, 1], [], []>} : vector<8x32xbf16>, vector<32x128xbf16>, vector<8x128xf32> -> vector<8x128xf32>
    %266 = arith.addf %183, %265 : vector<8x128xf32>
    %267 = arith.negf %266 : vector<8x128xf32>
    %268 = math.exp %267 : vector<8x128xf32>
    %cst_60 = arith.constant 1.000000e+00 : f32
    %269 = vector.broadcast %cst_60 : f32 to vector<8x128xf32>
    %270 = arith.addf %269, %268 : vector<8x128xf32>
    %271 = arith.divf %269, %270 : vector<8x128xf32>
    %272 = math.tanh %266 : vector<8x128xf32>
    %273 = vector.extract_strided_slice %271 {offsets = [0, 0], sizes = [8, 32], strides = [1, 1]} : vector<8x128xf32> to vector<8x32xf32>
    %274 = vector.extract_strided_slice %271 {offsets = [0, 32], sizes = [8, 32], strides = [1, 1]} : vector<8x128xf32> to vector<8x32xf32>
    %275 = vector.extract_strided_slice %272 {offsets = [0, 64], sizes = [8, 32], strides = [1, 1]} : vector<8x128xf32> to vector<8x32xf32>
    %276 = vector.extract_strided_slice %271 {offsets = [0, 96], sizes = [8, 32], strides = [1, 1]} : vector<8x128xf32> to vector<8x32xf32>
    %277 = arith.mulf %274, %260 : vector<8x32xf32>
    %278 = arith.mulf %273, %275 : vector<8x32xf32>
    %279 = arith.addf %277, %278 : vector<8x32xf32>
    %280 = math.tanh %279 : vector<8x32xf32>
    %281 = arith.mulf %276, %280 : vector<8x32xf32>
    %c0_61 = arith.constant 0 : index
    %c128 = arith.constant 128 : index
    %282 = vector.load %arg15[%c0_61, %c128] : memref<8x256xf32, #tpu.memory_space<vmem>>, vector<8x32xf32>
    tpu.vector_store %arg15[%c0_61, %c128], %281 {strides = array<i32>} : memref<8x256xf32, #tpu.memory_space<vmem>>, vector<8x32xf32>,
    %283 = arith.truncf %281 : vector<8x32xf32> to vector<8x32xbf16>
    %cst_62 = arith.constant dense<0.000000e+00> : vector<8x128xf32>
    %284 = tpu.matmul %283, %185, %cst_62 {dimension_numbers = #tpu.dot_dimension_numbers<[1], [0], [0], [1], [0, 0, 1, 1], [], []>} : vector<8x32xbf16>, vector<32x128xbf16>, vector<8x128xf32> -> vector<8x128xf32>
    %285 = arith.addf %183, %284 : vector<8x128xf32>
    %286 = arith.negf %285 : vector<8x128xf32>
    %287 = math.exp %286 : vector<8x128xf32>
    %cst_63 = arith.constant 1.000000e+00 : f32
    %288 = vector.broadcast %cst_63 : f32 to vector<8x128xf32>
    %289 = arith.addf %288, %287 : vector<8x128xf32>
    %290 = arith.divf %288, %289 : vector<8x128xf32>
    %291 = math.tanh %285 : vector<8x128xf32>
    %292 = vector.extract_strided_slice %290 {offsets = [0, 0], sizes = [8, 32], strides = [1, 1]} : vector<8x128xf32> to vector<8x32xf32>
    %293 = vector.extract_strided_slice %290 {offsets = [0, 32], sizes = [8, 32], strides = [1, 1]} : vector<8x128xf32> to vector<8x32xf32>
    %294 = vector.extract_strided_slice %291 {offsets = [0, 64], sizes = [8, 32], strides = [1, 1]} : vector<8x128xf32> to vector<8x32xf32>
    %295 = vector.extract_strided_slice %290 {offsets = [0, 96], sizes = [8, 32], strides = [1, 1]} : vector<8x128xf32> to vector<8x32xf32>
    %296 = arith.mulf %293, %279 : vector<8x32xf32>
    %297 = arith.mulf %292, %294 : vector<8x32xf32>
    %298 = arith.addf %296, %297 : vector<8x32xf32>
    %299 = math.tanh %298 : vector<8x32xf32>
    %300 = arith.mulf %295, %299 : vector<8x32xf32>
    %c0_64 = arith.constant 0 : index
    %c160 = arith.constant 160 : index
    %301 = vector.load %arg15[%c0_64, %c160] : memref<8x256xf32, #tpu.memory_space<vmem>>, vector<8x32xf32>
    tpu.vector_store %arg15[%c0_64, %c160], %300 {strides = array<i32>} : memref<8x256xf32, #tpu.memory_space<vmem>>, vector<8x32xf32>,
    %302 = arith.truncf %300 : vector<8x32xf32> to vector<8x32xbf16>
    %cst_65 = arith.constant dense<0.000000e+00> : vector<8x128xf32>
    %303 = tpu.matmul %302, %185, %cst_65 {dimension_numbers = #tpu.dot_dimension_numbers<[1], [0], [0], [1], [0, 0, 1, 1], [], []>} : vector<8x32xbf16>, vector<32x128xbf16>, vector<8x128xf32> -> vector<8x128xf32>
    %304 = arith.addf %183, %303 : vector<8x128xf32>
    %305 = arith.negf %304 : vector<8x128xf32>
    %306 = math.exp %305 : vector<8x128xf32>
    %cst_66 = arith.constant 1.000000e+00 : f32
    %307 = vector.broadcast %cst_66 : f32 to vector<8x128xf32>
    %308 = arith.addf %307, %306 : vector<8x128xf32>
    %309 = arith.divf %307, %308 : vector<8x128xf32>
    %310 = math.tanh %304 : vector<8x128xf32>
    %311 = vector.extract_strided_slice %309 {offsets = [0, 0], sizes = [8, 32], strides = [1, 1]} : vector<8x128xf32> to vector<8x32xf32>
    %312 = vector.extract_strided_slice %309 {offsets = [0, 32], sizes = [8, 32], strides = [1, 1]} : vector<8x128xf32> to vector<8x32xf32>
    %313 = vector.extract_strided_slice %310 {offsets = [0, 64], sizes = [8, 32], strides = [1, 1]} : vector<8x128xf32> to vector<8x32xf32>
    %314 = vector.extract_strided_slice %309 {offsets = [0, 96], sizes = [8, 32], strides = [1, 1]} : vector<8x128xf32> to vector<8x32xf32>
    %315 = arith.mulf %312, %298 : vector<8x32xf32>
    %316 = arith.mulf %311, %313 : vector<8x32xf32>
    %317 = arith.addf %315, %316 : vector<8x32xf32>
    %318 = math.tanh %317 : vector<8x32xf32>
    %319 = arith.mulf %314, %318 : vector<8x32xf32>
    %c0_67 = arith.constant 0 : index
    %c192 = arith.constant 192 : index
    %320 = vector.load %arg15[%c0_67, %c192] : memref<8x256xf32, #tpu.memory_space<vmem>>, vector<8x32xf32>
    tpu.vector_store %arg15[%c0_67, %c192], %319 {strides = array<i32>} : memref<8x256xf32, #tpu.memory_space<vmem>>, vector<8x32xf32>,
    %321 = arith.truncf %319 : vector<8x32xf32> to vector<8x32xbf16>
    %cst_68 = arith.constant dense<0.000000e+00> : vector<8x128xf32>
    %322 = tpu.matmul %321, %185, %cst_68 {dimension_numbers = #tpu.dot_dimension_numbers<[1], [0], [0], [1], [0, 0, 1, 1], [], []>} : vector<8x32xbf16>, vector<32x128xbf16>, vector<8x128xf32> -> vector<8x128xf32>
    %323 = arith.addf %183, %322 : vector<8x128xf32>
    %324 = arith.negf %323 : vector<8x128xf32>
    %325 = math.exp %324 : vector<8x128xf32>
    %cst_69 = arith.constant 1.000000e+00 : f32
    %326 = vector.broadcast %cst_69 : f32 to vector<8x128xf32>
    %327 = arith.addf %326, %325 : vector<8x128xf32>
    %328 = arith.divf %326, %327 : vector<8x128xf32>
    %329 = math.tanh %323 : vector<8x128xf32>
    %330 = vector.extract_strided_slice %328 {offsets = [0, 0], sizes = [8, 32], strides = [1, 1]} : vector<8x128xf32> to vector<8x32xf32>
    %331 = vector.extract_strided_slice %328 {offsets = [0, 32], sizes = [8, 32], strides = [1, 1]} : vector<8x128xf32> to vector<8x32xf32>
    %332 = vector.extract_strided_slice %329 {offsets = [0, 64], sizes = [8, 32], strides = [1, 1]} : vector<8x128xf32> to vector<8x32xf32>
    %333 = vector.extract_strided_slice %328 {offsets = [0, 96], sizes = [8, 32], strides = [1, 1]} : vector<8x128xf32> to vector<8x32xf32>
    %334 = arith.mulf %331, %317 : vector<8x32xf32>
    %335 = arith.mulf %330, %332 : vector<8x32xf32>
    %336 = arith.addf %334, %335 : vector<8x32xf32>
    %337 = math.tanh %336 : vector<8x32xf32>
    %338 = arith.mulf %333, %337 : vector<8x32xf32>
    %c0_70 = arith.constant 0 : index
    %c224 = arith.constant 224 : index
    %339 = vector.load %arg15[%c0_70, %c224] : memref<8x256xf32, #tpu.memory_space<vmem>>, vector<8x32xf32>
    tpu.vector_store %arg15[%c0_70, %c224], %338 {strides = array<i32>} : memref<8x256xf32, #tpu.memory_space<vmem>>, vector<8x32xf32>,
    %c0_71 = arith.constant 0 : index
    %c0_72 = arith.constant 0 : index
    %340 = vector.load %arg15[%c0_71, %c0_72] : memref<8x256xf32, #tpu.memory_space<vmem>>, vector<8x256xf32>
    %c0_73 = arith.constant 0 : index
    %c0_74 = arith.constant 0 : index
    %341 = vector.load %arg12[%c0_73, %c0_74] : memref<256x32xf32, #tpu.memory_space<vmem>>, vector<256x32xf32>
    %cst_75 = arith.constant dense<0.000000e+00> : vector<8x32xf32>
    %342 = tpu.matmul %340, %341, %cst_75 {dimension_numbers = #tpu.dot_dimension_numbers<[1], [0], [0], [1], [0, 0, 1, 1], [], []>} : vector<8x256xf32>, vector<256x32xf32>, vector<8x32xf32> -> vector<8x32xf32>
    %c0_76 = arith.constant 0 : index
    %c0_77 = arith.constant 0 : index
    %343 = vector.load %arg13[%c0_76, %c0_77] : memref<1x32xf32, #tpu.memory_space<vmem>>, vector<1x32xf32>
    %344 = vector.broadcast %343 : vector<1x32xf32> to vector<8x32xf32>
    %345 = arith.addf %342, %344 : vector<8x32xf32>
    %cst_78 = arith.constant 0.000000e+00 : f32
    %346 = vector.broadcast %cst_78 : f32 to vector<8x80xf32>
    %347 = tpu.concatenate %345, %171, %346 in 1 : vector<8x32xf32>, vector<8x16xf32>, vector<8x80xf32> -> vector<8x128xf32>
    %c0_79 = arith.constant 0 : index
    %c0_80 = arith.constant 0 : index
    %348 = vector.load %arg14[%c0_79, %c0_80] : memref<8x128xf32, #tpu.memory_space<vmem>>, vector<8x128xf32>
    tpu.vector_store %arg14[%c0_79, %c0_80], %347 {strides = array<i32>} : memref<8x128xf32, #tpu.memory_space<vmem>>, vector<8x128xf32>,
    return
  }
  func.func @transform_0(%arg0: i32) -> (i32, i32) {
    %c0_i32 = arith.constant 0 : i32
    %c0_i32_0 = arith.constant 0 : i32
    return %arg0, %c0_i32 : i32, i32
  }
  func.func @transform_1(%arg0: i32) -> (i32, i32) {
    %c0_i32 = arith.constant 0 : i32
    %c0_i32_0 = arith.constant 0 : i32
    %c0_i32_1 = arith.constant 0 : i32
    return %c0_i32, %c0_i32_0 : i32, i32
  }
  func.func @transform_2(%arg0: i32) -> (i32, i32) {
    %c0_i32 = arith.constant 0 : i32
    %c0_i32_0 = arith.constant 0 : i32
    %c0_i32_1 = arith.constant 0 : i32
    return %c0_i32, %c0_i32_0 : i32, i32
  }
  func.func @transform_3(%arg0: i32) -> (i32, i32) {
    %c0_i32 = arith.constant 0 : i32
    %c0_i32_0 = arith.constant 0 : i32
    %c0_i32_1 = arith.constant 0 : i32
    return %c0_i32, %c0_i32_0 : i32, i32
  }
  func.func @transform_4(%arg0: i32) -> (i32, i32) {
    %c0_i32 = arith.constant 0 : i32
    %c0_i32_0 = arith.constant 0 : i32
    %c0_i32_1 = arith.constant 0 : i32
    return %c0_i32, %c0_i32_0 : i32, i32
  }
  func.func @transform_5(%arg0: i32) -> (i32, i32) {
    %c0_i32 = arith.constant 0 : i32
    %c0_i32_0 = arith.constant 0 : i32
    %c0_i32_1 = arith.constant 0 : i32
    return %c0_i32, %c0_i32_0 : i32, i32
  }
  func.func @transform_6(%arg0: i32) -> (i32, i32) {
    %c0_i32 = arith.constant 0 : i32
    %c0_i32_0 = arith.constant 0 : i32
    %c0_i32_1 = arith.constant 0 : i32
    return %c0_i32, %c0_i32_0 : i32, i32
  }
  func.func @transform_7(%arg0: i32) -> (i32, i32) {
    %c0_i32 = arith.constant 0 : i32
    %c0_i32_0 = arith.constant 0 : i32
    %c0_i32_1 = arith.constant 0 : i32
    return %c0_i32, %c0_i32_0 : i32, i32
  }
  func.func @transform_8(%arg0: i32) -> (i32, i32) {
    %c0_i32 = arith.constant 0 : i32
    %c0_i32_0 = arith.constant 0 : i32
    %c0_i32_1 = arith.constant 0 : i32
    return %c0_i32, %c0_i32_0 : i32, i32
  }
  func.func @transform_9(%arg0: i32) -> (i32, i32) {
    %c0_i32 = arith.constant 0 : i32
    %c0_i32_0 = arith.constant 0 : i32
    %c0_i32_1 = arith.constant 0 : i32
    return %c0_i32, %c0_i32_0 : i32, i32
  }
  func.func @transform_10(%arg0: i32) -> (i32, i32) {
    %c0_i32 = arith.constant 0 : i32
    %c0_i32_0 = arith.constant 0 : i32
    %c0_i32_1 = arith.constant 0 : i32
    return %c0_i32, %c0_i32_0 : i32, i32
  }
  func.func @transform_11(%arg0: i32) -> (i32, i32) {
    %c0_i32 = arith.constant 0 : i32
    %c0_i32_0 = arith.constant 0 : i32
    %c0_i32_1 = arith.constant 0 : i32
    return %c0_i32, %c0_i32_0 : i32, i32
  }
  func.func @transform_12(%arg0: i32) -> (i32, i32) {
    %c0_i32 = arith.constant 0 : i32
    %c0_i32_0 = arith.constant 0 : i32
    %c0_i32_1 = arith.constant 0 : i32
    return %c0_i32, %c0_i32_0 : i32, i32
  }
  func.func @transform_13(%arg0: i32) -> (i32, i32) {
    %c0_i32 = arith.constant 0 : i32
    %c0_i32_0 = arith.constant 0 : i32
    return %arg0, %c0_i32 : i32, i32
  }
}

</mosaic_0001>

<llo_original>
// kernel: tpu_custom_call.1
$region0: #{tpu_custom_call.1}
  #allocation0 [shape = 'u32[]', space=smem, size = 0x4, offset = 0x4, fixed_abs, tag = 'smem constant byte address 0x4 - core index']
  #allocation1 [shape = 'u32[144,128]{1,0:T(1,128)}', space=vmem, size = 0x12000, scoped, tag = 'internal scratch']
  #allocation2 [shape = 'f32[8,256]{1,0:T(8,128)}', space=vmem, size = 0x2000, scoped, tag = 'scratch operand']
  %s0 = inlined_call_operand.vmem [shape: f32[8,32], index: 0, kind: input, shape index: {}]
  %s1 = inlined_call_operand.vmem [shape: f32[32,1024], index: 1, kind: input, shape index: {}]
  %s2 = inlined_call_operand.hbm [shape: f32[1,1024], index: 2, kind: input, shape index: {}]
  %s3 = inlined_call_operand.vmem [shape: f32[32,128], index: 3, kind: input, shape index: {}]
  %s4 = inlined_call_operand.vmem [shape: f32[32,16], index: 4, kind: input, shape index: {}]
  %s5 = inlined_call_operand.vmem [shape: f32[1,16], index: 5, kind: input, shape index: {}]
  %s6 = inlined_call_operand.vmem [shape: f32[16,32], index: 6, kind: input, shape index: {}]
  %s7 = inlined_call_operand.hbm [shape: f32[1,32], index: 7, kind: input, shape index: {}]
  %s8 = inlined_call_operand.vmem [shape: f32[32,128], index: 8, kind: input, shape index: {}]
  %s9 = inlined_call_operand.hbm [shape: f32[32,128], index: 9, kind: input, shape index: {}]
  %s10 = inlined_call_operand.hbm [shape: f32[1,128], index: 10, kind: input, shape index: {}]
  %s11 = inlined_call_operand.vmem [shape: f32[256,32], index: 11, kind: input, shape index: {}]
  %s12 = inlined_call_operand.vmem [shape: f32[1,32], index: 12, kind: input, shape index: {}]
  %s13 = inlined_call_operand.hbm [shape: f32[8,128], index: 13, kind: output, shape index: {}]
  %s14 = sld [smem:[#allocation0]]
  $region78: #{tpu_custom_call.1} parent=0
    _
  %s16 = ssub.s32 1, %s14
  %s17 = scalar_select 0, %s16, %s14
  $region1: #{tpu_custom_call.1} parent=0
    #allocation3 [shape = 'u8[4096]{0}', space=vmem, size = 0x1000, scoped, tag = 'input window, operand 2, single buffered']
    #allocation4 [shape = 's32[1]{0}', space=sflag, size = 0x4, scoped, tag = 'scoped memory for tpu_custom_call.1']
    #allocation5 [shape = 's32[1]{0}', space=sflag, size = 0x4, scoped, tag = 'scoped memory for tpu_custom_call.1']
    #allocation6 [shape = 'u8[512]{0}', space=vmem, size = 0x400, scoped, tag = 'input window, operand 7, single buffered']
    #allocation7 [shape = 's32[1]{0}', space=sflag, size = 0x4, scoped, tag = 'scoped memory for tpu_custom_call.1']
    #allocation8 [shape = 'u8[16384]{0}', space=vmem, size = 0x4000, scoped, tag = 'input window, operand 9, single buffered']
    #allocation9 [shape = 'u8[512]{0}', space=vmem, size = 0x400, scoped, tag = 'input window, operand 10, single buffered']
    #allocation10 [shape = 's32[1]{0}', space=sflag, size = 0x4, scoped, tag = 'scoped memory for tpu_custom_call.1']
    #allocation11 [shape = 'u8[4096]{0}', space=vmem, size = 0x1000, scoped, tag = 'output window, operand 0, single buffered']
    %18 = vsyncpa [#allocation4], 0
    %19 = vsyncpa [#allocation7], 0
    %20 = vsyncpa [#allocation10], 0
    %21 = vsyncpa [#allocation5], 0
    // Predicated region
    $region2: #{tpu_custom_call.1} parent=1 // pred_check
      _
    $region3: #{tpu_custom_call.1} parent=1 // pred_check_branch
      %23 = sbr.rel (0) target = $region5
    $region4: #{tpu_custom_call.1} parent=1 // pred_region
      _
    $region5: #{tpu_custom_call.1} parent=1 // pred_fallthru
      _
    // Predicated region
    $region6: #{tpu_custom_call.1} parent=1 // pred_check
      _
    $region7: #{tpu_custom_call.1} parent=1 // pred_check_branch
      %25 = sbr.rel (0) target = $region9
    $region8: #{tpu_custom_call.1} parent=1 // pred_region
      _
    $region9: #{tpu_custom_call.1} parent=1 // pred_fallthru
      _
    // Predicated region
    $region10: #{tpu_custom_call.1} parent=1 // pred_check
      _
    $region11: #{tpu_custom_call.1} parent=1 // pred_check_branch
      %27 = sbr.rel (0) target = $region13
    $region12: #{tpu_custom_call.1} parent=1 // pred_region
      %s29 = ssub.s32 128, 128
      %30 = vsyncadd [#allocation4], %s29
      %s32 = sshll.u32 [#allocation3], 4
      %s33 = int_to_ptr.vmem [resolvable:$true] %s32
      %35 = dma.hbm_to_vmem [thread:$0]  %s2, 128, %s33, [#allocation4]
    $region13: #{tpu_custom_call.1} parent=1 // pred_fallthru
      _
    // Predicated region
    $region14: #{tpu_custom_call.1} parent=1 // pred_check
      _
    $region15: #{tpu_custom_call.1} parent=1 // pred_check_branch
      %37 = sbr.rel (0) target = $region17
    $region16: #{tpu_custom_call.1} parent=1 // pred_region
      _
    $region17: #{tpu_custom_call.1} parent=1 // pred_fallthru
      _
    // Predicated region
    $region18: #{tpu_custom_call.1} parent=1 // pred_check
      _
    $region19: #{tpu_custom_call.1} parent=1 // pred_check_branch
      %39 = sbr.rel (0) target = $region21
    $region20: #{tpu_custom_call.1} parent=1 // pred_region
      _
    $region21: #{tpu_custom_call.1} parent=1 // pred_fallthru
      _
    // Predicated region
    $region22: #{tpu_custom_call.1} parent=1 // pred_check
      _
    $region23: #{tpu_custom_call.1} parent=1 // pred_check_branch
      %41 = sbr.rel (0) target = $region25
    $region24: #{tpu_custom_call.1} parent=1 // pred_region
      _
    $region25: #{tpu_custom_call.1} parent=1 // pred_fallthru
      _
    // Predicated region
    $region26: #{tpu_custom_call.1} parent=1 // pred_check
      _
    $region27: #{tpu_custom_call.1} parent=1 // pred_check_branch
      %43 = sbr.rel (0) target = $region29
    $region28: #{tpu_custom_call.1} parent=1 // pred_region
      _
    $region29: #{tpu_custom_call.1} parent=1 // pred_fallthru
      _
    // Predicated region
    $region30: #{tpu_custom_call.1} parent=1 // pred_check
      _
    $region31: #{tpu_custom_call.1} parent=1 // pred_check_branch
      %45 = sbr.rel (0) target = $region33
    $region32: #{tpu_custom_call.1} parent=1 // pred_region
      %s47 = ssub.s32 16, 16
      %48 = vsyncadd [#allocation7], %s47
      %s50 = sshll.u32 [#allocation6], 4
      %s51 = int_to_ptr.vmem [resolvable:$true] %s50
      %53 = dma.hbm_to_vmem [thread:$0]  %s7, 16, %s51, [#allocation7]
    $region33: #{tpu_custom_call.1} parent=1 // pred_fallthru
      _
    // Predicated region
    $region34: #{tpu_custom_call.1} parent=1 // pred_check
      _
    $region35: #{tpu_custom_call.1} parent=1 // pred_check_branch
      %55 = sbr.rel (0) target = $region37
    $region36: #{tpu_custom_call.1} parent=1 // pred_region
      _
    $region37: #{tpu_custom_call.1} parent=1 // pred_fallthru
      _
    // Predicated region
    $region38: #{tpu_custom_call.1} parent=1 // pred_check
      _
    $region39: #{tpu_custom_call.1} parent=1 // pred_check_branch
      %57 = sbr.rel (0) target = $region41
    $region40: #{tpu_custom_call.1} parent=1 // pred_region
      %s59 = ssub.s32 512, 512
      %60 = vsyncadd [#allocation7], %s59
      %s61 = sshll.u32 [#allocation8], 4
      %s62 = int_to_ptr.vmem [resolvable:$true] %s61
      %67 = dma.hbm_to_vmem [thread:$0]  %s9, 512, %s62, [#allocation7], 128, 128, 8
    $region41: #{tpu_custom_call.1} parent=1 // pred_fallthru
      _
    // Predicated region
    $region42: #{tpu_custom_call.1} parent=1 // pred_check
      _
    $region43: #{tpu_custom_call.1} parent=1 // pred_check_branch
      %69 = sbr.rel (0) target = $region45
    $region44: #{tpu_custom_call.1} parent=1 // pred_region
      %s71 = ssub.s32 16, 16
      %72 = vsyncadd [#allocation10], %s71
      %s74 = sshll.u32 [#allocation9], 4
      %s75 = int_to_ptr.vmem [resolvable:$true] %s74
      %77 = dma.hbm_to_vmem [thread:$0]  %s10, 16, %s75, [#allocation10]
    $region45: #{tpu_custom_call.1} parent=1 // pred_fallthru
      _
    // Predicated region
    $region46: #{tpu_custom_call.1} parent=1 // pred_check
      _
    $region47: #{tpu_custom_call.1} parent=1 // pred_check_branch
      %79 = sbr.rel (0) target = $region49
    $region48: #{tpu_custom_call.1} parent=1 // pred_region
      _
    $region49: #{tpu_custom_call.1} parent=1 // pred_fallthru
      _
    // Predicated region
    $region50: #{tpu_custom_call.1} parent=1 // pred_check
      _
    $region51: #{tpu_custom_call.1} parent=1 // pred_check_branch
      %81 = sbr.rel (0) target = $region53
    $region52: #{tpu_custom_call.1} parent=1 // pred_region
      _
    $region53: #{tpu_custom_call.1} parent=1 // pred_fallthru
      _
    // Predicated region
    $region54: #{tpu_custom_call.1} parent=1 // pred_check
      _
    $region55: #{tpu_custom_call.1} parent=1 // pred_check_branch
      %83 = sbr.rel (0) target = $region57
    $region56: #{tpu_custom_call.1} parent=1 // pred_region
      %84 = dma.done [#allocation4], 128
    $region57: #{tpu_custom_call.1} parent=1 // pred_fallthru
      _
    // Predicated region
    $region58: #{tpu_custom_call.1} parent=1 // pred_check
      _
    $region59: #{tpu_custom_call.1} parent=1 // pred_check_branch
      %86 = sbr.rel (0) target = $region61
    $region60: #{tpu_custom_call.1} parent=1 // pred_region
      %87 = dma.done [#allocation7], 16
    $region61: #{tpu_custom_call.1} parent=1 // pred_fallthru
      _
    // Predicated region
    $region62: #{tpu_custom_call.1} parent=1 // pred_check
      _
    $region63: #{tpu_custom_call.1} parent=1 // pred_check_branch
      %89 = sbr.rel (0) target = $region65
    $region64: #{tpu_custom_call.1} parent=1 // pred_region
      %90 = dma.done [#allocation7], 512
    $region65: #{tpu_custom_call.1} parent=1 // pred_fallthru
      _
    // Predicated region
    $region66: #{tpu_custom_call.1} parent=1 // pred_check
      _
    $region67: #{tpu_custom_call.1} parent=1 // pred_check_branch
      %92 = sbr.rel (0) target = $region69
    $region68: #{tpu_custom_call.1} parent=1 // pred_region
      %93 = dma.done [#allocation10], 16
    $region69: #{tpu_custom_call.1} parent=1 // pred_fallthru
      _
    %v95 = vld [vmem:[%s0] sm:$0xff]
    %v96 = vld [vmem:[%s1] sm:$0xff]
    %v97 = vld [vmem:[%s1 + $0x8] sm:$0xff]
    %v98 = vld [vmem:[%s1 + $0x10] sm:$0xff]
    %v99 = vld [vmem:[%s1 + $0x18] sm:$0xff]
    %v100 = vld [vmem:[%s1 + $0x20] sm:$0xff]
    %v101 = vld [vmem:[%s1 + $0x28] sm:$0xff]
    %v102 = vld [vmem:[%s1 + $0x30] sm:$0xff]
    %v103 = vld [vmem:[%s1 + $0x38] sm:$0xff]
    %v104 = vld [vmem:[%s1 + $0x40] sm:$0xff]
    %v105 = vld [vmem:[%s1 + $0x48] sm:$0xff]
    %v106 = vld [vmem:[%s1 + $0x50] sm:$0xff]
    %v107 = vld [vmem:[%s1 + $0x58] sm:$0xff]
    %v108 = vld [vmem:[%s1 + $0x60] sm:$0xff]
    %v109 = vld [vmem:[%s1 + $0x68] sm:$0xff]
    %v110 = vld [vmem:[%s1 + $0x70] sm:$0xff]
    %v111 = vld [vmem:[%s1 + $0x78] sm:$0xff]
    %v112 = vld [vmem:[%s1 + $0x80] sm:$0xff]
    %v113 = vld [vmem:[%s1 + $0x88] sm:$0xff]
    %v114 = vld [vmem:[%s1 + $0x90] sm:$0xff]
    %v115 = vld [vmem:[%s1 + $0x98] sm:$0xff]
    %v116 = vld [vmem:[%s1 + $0xa0] sm:$0xff]
    %v117 = vld [vmem:[%s1 + $0xa8] sm:$0xff]
    %v118 = vld [vmem:[%s1 + $0xb0] sm:$0xff]
    %v119 = vld [vmem:[%s1 + $0xb8] sm:$0xff]
    %v120 = vld [vmem:[%s1 + $0xc0] sm:$0xff]
    %v121 = vld [vmem:[%s1 + $0xc8] sm:$0xff]
    %v122 = vld [vmem:[%s1 + $0xd0] sm:$0xff]
    %v123 = vld [vmem:[%s1 + $0xd8] sm:$0xff]
    %v124 = vld [vmem:[%s1 + $0xe0] sm:$0xff]
    %v125 = vld [vmem:[%s1 + $0xe8] sm:$0xff]
    %v126 = vld [vmem:[%s1 + $0xf0] sm:$0xff]
    %v127 = vld [vmem:[%s1 + $0xf8] sm:$0xff]
    %v128 = vld [vmem:[#allocation3] sm:$0xff]
    %v130 = vlaneseq
    %v131 = vshrl.u32 %v130, 7
    %v132 = vsub.s32 0, %v131
    %v133 = vrot.slane %v128, %v132
    %v134 = vlaneseq
    %v135 = vshrl.u32 %v134, 7
    %v136 = vsub.s32 1, %v135
    %v137 = vrot.slane %v128, %v136
    %v138 = vlaneseq
    %v139 = vshrl.u32 %v138, 7
    %v140 = vsub.s32 2, %v139
    %v141 = vrot.slane %v128, %v140
    %v142 = vlaneseq
    %v143 = vshrl.u32 %v142, 7
    %v144 = vsub.s32 3, %v143
    %v145 = vrot.slane %v128, %v144
    %v146 = vlaneseq
    %v147 = vshrl.u32 %v146, 7
    %v148 = vsub.s32 4, %v147
    %v149 = vrot.slane %v128, %v148
    %v150 = vlaneseq
    %v151 = vshrl.u32 %v150, 7
    %v152 = vsub.s32 5, %v151
    %v153 = vrot.slane %v128, %v152
    %v154 = vlaneseq
    %v155 = vshrl.u32 %v154, 7
    %v156 = vsub.s32 6, %v155
    %v157 = vrot.slane %v128, %v156
    %v158 = vlaneseq
    %v159 = vshrl.u32 %v158, 7
    %v160 = vsub.s32 7, %v159
    %v161 = vrot.slane %v128, %v160
    %vm170 = vcmask 261120
    %v172 = vsel %vm170, %v95, 0
    %174 = vmatprep.subr.mxu0 %v97
    %175 = vmatpush1.msra.mxu0 %v96
    %176 = vmatprep.subr.mxu0 %v105
    %177 = vmatpush1.msra.mxu0 %v104
    %178 = vmatprep.subr.mxu0 %v113
    %179 = vmatpush1.msra.mxu0 %v112
    %180 = vmatprep.subr.mxu0 %v121
    %181 = vmatpush1.msra.mxu0 %v120
    %182 = vmatprep.subr.mxu0 0.0
    %183 = vmatpush1.msra.mxu0 0.0
    %184 = vmatprep.subr.mxu0 0.0
    %185 = vmatpush1.msra.mxu0 0.0
    %186 = vmatprep.subr.mxu0 0.0
    %187 = vmatpush1.msra.mxu0 0.0
    %188 = vmatprep.subr.mxu0 0.0
    %189 = vmatpush1.msra.mxu0 0.0
    %190 = vmatprep.subr.mxu0 0.0
    %191 = vmatpush1.msra.mxu0 0.0
    %192 = vmatprep.subr.mxu0 0.0
    %193 = vmatpush1.msra.mxu0 0.0
    %194 = vmatprep.subr.mxu0 0.0
    %195 = vmatpush1.msra.mxu0 0.0
    %196 = vmatprep.subr.mxu0 0.0
    %197 = vmatpush1.msra.mxu0 0.0
    %198 = vmatprep.subr.mxu0 0.0
    %199 = vmatpush1.msra.mxu0 0.0
    %200 = vmatprep.subr.mxu0 0.0
    %201 = vmatpush1.msra.mxu0 0.0
    %202 = vmatprep.subr.mxu0 0.0
    %203 = vmatpush1.msra.mxu0 0.0
    %204 = vmatprep.subr.mxu0 0.0
    %205 = vmatpush1.msra.mxu0 0.0
    %206 = vmatprep.subr.mxu0 0.0
    %207 = vmatpush1.msra.mxu0 0.0
    %208 = vmatprep.subr.mxu0 0.0
    %209 = vmatpush1.msra.mxu0 0.0
    %210 = vmatprep.subr.mxu0 0.0
    %211 = vmatpush1.msra.mxu0 0.0
    %212 = vmatprep.subr.mxu0 0.0
    %213 = vmatpush1.msra.mxu0 0.0
    %214 = vmatprep.subr.mxu0 0.0
    %215 = vmatpush1.msra.mxu0 0.0
    %216 = vmatprep.subr.mxu0 0.0
    %217 = vmatpush1.msra.mxu0 0.0
    %218 = vmatprep.subr.mxu0 0.0
    %219 = vmatpush1.msra.mxu0 0.0
    %220 = vmatprep.subr.mxu0 0.0
    %221 = vmatpush1.msra.mxu0 0.0
    %222 = vmatprep.subr.mxu0 0.0
    %223 = vmatpush1.msra.mxu0 0.0
    %224 = vmatprep.subr.mxu0 0.0
    %225 = vmatpush1.msra.mxu0 0.0
    %226 = vmatprep.subr.mxu0 0.0
    %227 = vmatpush1.msra.mxu0 0.0
    %228 = vmatprep.subr.mxu0 0.0
    %229 = vmatpush1.msra.mxu0 0.0
    %230 = vmatprep.subr.mxu0 0.0
    %231 = vmatpush1.msra.mxu0 0.0
    %232 = vmatprep.subr.mxu0 0.0
    %233 = vmatpush1.msra.mxu0 0.0
    %234 = vmatprep.subr.mxu0 0.0
    %235 = vmatpush1.msra.mxu0 0.0
    %236 = vmatprep.subr.mxu0 0.0
    %237 = vmatpush1.msra.mxu0 0.0
    %238 = vmatprep.mubr.f32.mxu0 0.0
    %239 = vmatmul.mubr.f32.gmra.mrb[0].mxu0 %v172
    %v240 = vpop.f32.mrb[0].mxu0
    %v241 = vadd.f32 %v133, %v240
    %v242 = vpop.f32.mrb[0].mxu0
    %v243 = vadd.f32 %v137, %v242
    %244 = vdwg.mxu0
    %245 = vmatprep.subr.mxu0 %v99
    %246 = vmatpush1.msra.mxu0 %v98
    %247 = vmatprep.subr.mxu0 %v107
    %248 = vmatpush1.msra.mxu0 %v106
    %249 = vmatprep.subr.mxu0 %v115
    %250 = vmatpush1.msra.mxu0 %v114
    %251 = vmatprep.subr.mxu0 %v123
    %252 = vmatpush1.msra.mxu0 %v122
    %253 = vmatprep.subr.mxu0 0.0
    %254 = vmatpush1.msra.mxu0 0.0
    %255 = vmatprep.subr.mxu0 0.0
    %256 = vmatpush1.msra.mxu0 0.0
    %257 = vmatprep.subr.mxu0 0.0
    %258 = vmatpush1.msra.mxu0 0.0
    %259 = vmatprep.subr.mxu0 0.0
    %260 = vmatpush1.msra.mxu0 0.0
    %261 = vmatprep.subr.mxu0 0.0
    %262 = vmatpush1.msra.mxu0 0.0
    %263 = vmatprep.subr.mxu0 0.0
    %264 = vmatpush1.msra.mxu0 0.0
    %265 = vmatprep.subr.mxu0 0.0
    %266 = vmatpush1.msra.mxu0 0.0
    %267 = vmatprep.subr.mxu0 0.0
    %268 = vmatpush1.msra.mxu0 0.0
    %269 = vmatprep.subr.mxu0 0.0
    %270 = vmatpush1.msra.mxu0 0.0
    %271 = vmatprep.subr.mxu0 0.0
    %272 = vmatpush1.msra.mxu0 0.0
    %273 = vmatprep.subr.mxu0 0.0
    %274 = vmatpush1.msra.mxu0 0.0
    %275 = vmatprep.subr.mxu0 0.0
    %276 = vmatpush1.msra.mxu0 0.0
    %277 = vmatprep.subr.mxu0 0.0
    %278 = vmatpush1.msra.mxu0 0.0
    %279 = vmatprep.subr.mxu0 0.0
    %280 = vmatpush1.msra.mxu0 0.0
    %281 = vmatprep.subr.mxu0 0.0
    %282 = vmatpush1.msra.mxu0 0.0
    %283 = vmatprep.subr.mxu0 0.0
    %284 = vmatpush1.msra.mxu0 0.0
    %285 = vmatprep.subr.mxu0 0.0
    %286 = vmatpush1.msra.mxu0 0.0
    %287 = vmatprep.subr.mxu0 0.0
    %288 = vmatpush1.msra.mxu0 0.0
    %289 = vmatprep.subr.mxu0 0.0
    %290 = vmatpush1.msra.mxu0 0.0
    %291 = vmatprep.subr.mxu0 0.0
    %292 = vmatpush1.msra.mxu0 0.0
    %293 = vmatprep.subr.mxu0 0.0
    %294 = vmatpush1.msra.mxu0 0.0
    %295 = vmatprep.subr.mxu0 0.0
    %296 = vmatpush1.msra.mxu0 0.0
    %297 = vmatprep.subr.mxu0 0.0
    %298 = vmatpush1.msra.mxu0 0.0
    %299 = vmatprep.subr.mxu0 0.0
    %300 = vmatpush1.msra.mxu0 0.0
    %301 = vmatprep.subr.mxu0 0.0
    %302 = vmatpush1.msra.mxu0 0.0
    %303 = vmatprep.subr.mxu0 0.0
    %304 = vmatpush1.msra.mxu0 0.0
    %305 = vmatprep.subr.mxu0 0.0
    %306 = vmatpush1.msra.mxu0 0.0
    %307 = vmatprep.subr.mxu0 0.0
    %308 = vmatpush1.msra.mxu0 0.0
    %309 = vmatprep.mubr.f32.mxu0 0.0
    %310 = vmatmul.mubr.f32.gmra.mrb[0].mxu0 %v172
    %v311 = vpop.f32.mrb[0].mxu0
    %v312 = vadd.f32 %v141, %v311
    %v313 = vpop.f32.mrb[0].mxu0
    %v314 = vadd.f32 %v145, %v313
    %315 = vdwg.mxu0
    %316 = vmatprep.subr.mxu0 %v101
    %317 = vmatpush1.msra.mxu0 %v100
    %318 = vmatprep.subr.mxu0 %v109
    %319 = vmatpush1.msra.mxu0 %v108
    %320 = vmatprep.subr.mxu0 %v117
    %321 = vmatpush1.msra.mxu0 %v116
    %322 = vmatprep.subr.mxu0 %v125
    %323 = vmatpush1.msra.mxu0 %v124
    %324 = vmatprep.subr.mxu0 0.0
    %325 = vmatpush1.msra.mxu0 0.0
    %326 = vmatprep.subr.mxu0 0.0
    %327 = vmatpush1.msra.mxu0 0.0
    %328 = vmatprep.subr.mxu0 0.0
    %329 = vmatpush1.msra.mxu0 0.0
    %330 = vmatprep.subr.mxu0 0.0
    %331 = vmatpush1.msra.mxu0 0.0
    %332 = vmatprep.subr.mxu0 0.0
    %333 = vmatpush1.msra.mxu0 0.0
    %334 = vmatprep.subr.mxu0 0.0
    %335 = vmatpush1.msra.mxu0 0.0
    %336 = vmatprep.subr.mxu0 0.0
    %337 = vmatpush1.msra.mxu0 0.0
    %338 = vmatprep.subr.mxu0 0.0
    %339 = vmatpush1.msra.mxu0 0.0
    %340 = vmatprep.subr.mxu0 0.0
    %341 = vmatpush1.msra.mxu0 0.0
    %342 = vmatprep.subr.mxu0 0.0
    %343 = vmatpush1.msra.mxu0 0.0
    %344 = vmatprep.subr.mxu0 0.0
    %345 = vmatpush1.msra.mxu0 0.0
    %346 = vmatprep.subr.mxu0 0.0
    %347 = vmatpush1.msra.mxu0 0.0
    %348 = vmatprep.subr.mxu0 0.0
    %349 = vmatpush1.msra.mxu0 0.0
    %350 = vmatprep.subr.mxu0 0.0
    %351 = vmatpush1.msra.mxu0 0.0
    %352 = vmatprep.subr.mxu0 0.0
    %353 = vmatpush1.msra.mxu0 0.0
    %354 = vmatprep.subr.mxu0 0.0
    %355 = vmatpush1.msra.mxu0 0.0
    %356 = vmatprep.subr.mxu0 0.0
    %357 = vmatpush1.msra.mxu0 0.0
    %358 = vmatprep.subr.mxu0 0.0
    %359 = vmatpush1.msra.mxu0 0.0
    %360 = vmatprep.subr.mxu0 0.0
    %361 = vmatpush1.msra.mxu0 0.0
    %362 = vmatprep.subr.mxu0 0.0
    %363 = vmatpush1.msra.mxu0 0.0
    %364 = vmatprep.subr.mxu0 0.0
    %365 = vmatpush1.msra.mxu0 0.0
    %366 = vmatprep.subr.mxu0 0.0
    %367 = vmatpush1.msra.mxu0 0.0
    %368 = vmatprep.subr.mxu0 0.0
    %369 = vmatpush1.msra.mxu0 0.0
    %370 = vmatprep.subr.mxu0 0.0
    %371 = vmatpush1.msra.mxu0 0.0
    %372 = vmatprep.subr.mxu0 0.0
    %373 = vmatpush1.msra.mxu0 0.0
    %374 = vmatprep.subr.mxu0 0.0
    %375 = vmatpush1.msra.mxu0 0.0
    %376 = vmatprep.subr.mxu0 0.0
    %377 = vmatpush1.msra.mxu0 0.0
    %378 = vmatprep.subr.mxu0 0.0
    %379 = vmatpush1.msra.mxu0 0.0
    %380 = vmatprep.mubr.f32.mxu0 0.0
    %381 = vmatmul.mubr.f32.gmra.mrb[0].mxu0 %v172
    %v382 = vpop.f32.mrb[0].mxu0
    %v383 = vadd.f32 %v149, %v382
    %v384 = vpop.f32.mrb[0].mxu0
    %v385 = vadd.f32 %v153, %v384
    %386 = vdwg.mxu0
    %387 = vmatprep.subr.mxu0 %v103
    %388 = vmatpush1.msra.mxu0 %v102
    %389 = vmatprep.subr.mxu0 %v111
    %390 = vmatpush1.msra.mxu0 %v110
    %391 = vmatprep.subr.mxu0 %v119
    %392 = vmatpush1.msra.mxu0 %v118
    %393 = vmatprep.subr.mxu0 %v127
    %394 = vmatpush1.msra.mxu0 %v126
    %395 = vmatprep.subr.mxu0 0.0
    %396 = vmatpush1.msra.mxu0 0.0
    %397 = vmatprep.subr.mxu0 0.0
    %398 = vmatpush1.msra.mxu0 0.0
    %399 = vmatprep.subr.mxu0 0.0
    %400 = vmatpush1.msra.mxu0 0.0
    %401 = vmatprep.subr.mxu0 0.0
    %402 = vmatpush1.msra.mxu0 0.0
    %403 = vmatprep.subr.mxu0 0.0
    %404 = vmatpush1.msra.mxu0 0.0
    %405 = vmatprep.subr.mxu0 0.0
    %406 = vmatpush1.msra.mxu0 0.0
    %407 = vmatprep.subr.mxu0 0.0
    %408 = vmatpush1.msra.mxu0 0.0
    %409 = vmatprep.subr.mxu0 0.0
    %410 = vmatpush1.msra.mxu0 0.0
    %411 = vmatprep.subr.mxu0 0.0
    %412 = vmatpush1.msra.mxu0 0.0
    %413 = vmatprep.subr.mxu0 0.0
    %414 = vmatpush1.msra.mxu0 0.0
    %415 = vmatprep.subr.mxu0 0.0
    %416 = vmatpush1.msra.mxu0 0.0
    %417 = vmatprep.subr.mxu0 0.0
    %418 = vmatpush1.msra.mxu0 0.0
    %419 = vmatprep.subr.mxu0 0.0
    %420 = vmatpush1.msra.mxu0 0.0
    %421 = vmatprep.subr.mxu0 0.0
    %422 = vmatpush1.msra.mxu0 0.0
    %423 = vmatprep.subr.mxu0 0.0
    %424 = vmatpush1.msra.mxu0 0.0
    %425 = vmatprep.subr.mxu0 0.0
    %426 = vmatpush1.msra.mxu0 0.0
    %427 = vmatprep.subr.mxu0 0.0
    %428 = vmatpush1.msra.mxu0 0.0
    %429 = vmatprep.subr.mxu0 0.0
    %430 = vmatpush1.msra.mxu0 0.0
    %431 = vmatprep.subr.mxu0 0.0
    %432 = vmatpush1.msra.mxu0 0.0
    %433 = vmatprep.subr.mxu0 0.0
    %434 = vmatpush1.msra.mxu0 0.0
    %435 = vmatprep.subr.mxu0 0.0
    %436 = vmatpush1.msra.mxu0 0.0
    %437 = vmatprep.subr.mxu0 0.0
    %438 = vmatpush1.msra.mxu0 0.0
    %439 = vmatprep.subr.mxu0 0.0
    %440 = vmatpush1.msra.mxu0 0.0
    %441 = vmatprep.subr.mxu0 0.0
    %442 = vmatpush1.msra.mxu0 0.0
    %443 = vmatprep.subr.mxu0 0.0
    %444 = vmatpush1.msra.mxu0 0.0
    %445 = vmatprep.subr.mxu0 0.0
    %446 = vmatpush1.msra.mxu0 0.0
    %447 = vmatprep.subr.mxu0 0.0
    %448 = vmatpush1.msra.mxu0 0.0
    %449 = vmatprep.subr.mxu0 0.0
    %450 = vmatpush1.msra.mxu0 0.0
    %451 = vmatprep.mubr.f32.mxu0 0.0
    %452 = vmatmul.mubr.f32.gmra.mrb[0].mxu0 %v172
    %v453 = vpop.f32.mrb[0].mxu0
    %v454 = vadd.f32 %v157, %v453
    %v455 = vpop.f32.mrb[0].mxu0
    %v456 = vadd.f32 %v161, %v455
    %457 = vdwg.mxu0
    %v458 = vld [vmem:[%s3] sm:$0xff]
    %v459 = vld [vmem:[%s3 + $0x8] sm:$0xff]
    %v460 = vld [vmem:[%s3 + $0x10] sm:$0xff]
    %v461 = vld [vmem:[%s3 + $0x18] sm:$0xff]
    %v462 = vpack.c.bf16 %v459, %v458
    %v463 = vpack.c.bf16 %v461, %v460
    %v465 = vsel %vm170, 0, 0
    %467 = vmatprep.subr.bf16.mxu0 0
    %468 = vmatpush1.bf16.msra.mxu0 %v462
    %469 = vmatprep.subr.bf16.mxu0 0
    %470 = vmatpush1.bf16.msra.mxu0 %v463
    %471 = vmatprep.subr.bf16.mxu0 0
    %472 = vmatpush1.bf16.msra.mxu0 0
    %473 = vmatprep.subr.bf16.mxu0 0
    %474 = vmatpush1.bf16.msra.mxu0 0
    %475 = vmatprep.subr.bf16.mxu0 0
    %476 = vmatpush1.bf16.msra.mxu0 0
    %477 = vmatprep.subr.bf16.mxu0 0
    %478 = vmatpush1.bf16.msra.mxu0 0
    %479 = vmatprep.subr.bf16.mxu0 0
    %480 = vmatpush1.bf16.msra.mxu0 0
    %481 = vmatprep.subr.bf16.mxu0 0
    %482 = vmatpush1.bf16.msra.mxu0 0
    %483 = vmatprep.subr.bf16.mxu0 0
    %484 = vmatpush1.bf16.msra.mxu0 0
    %485 = vmatprep.subr.bf16.mxu0 0
    %486 = vmatpush1.bf16.msra.mxu0 0
    %487 = vmatprep.subr.bf16.mxu0 0
    %488 = vmatpush1.bf16.msra.mxu0 0
    %489 = vmatprep.subr.bf16.mxu0 0
    %490 = vmatpush1.bf16.msra.mxu0 0
    %491 = vmatprep.subr.bf16.mxu0 0
    %492 = vmatpush1.bf16.msra.mxu0 0
    %493 = vmatprep.subr.bf16.mxu0 0
    %494 = vmatpush1.bf16.msra.mxu0 0
    %495 = vmatprep.subr.bf16.mxu0 0
    %496 = vmatpush1.bf16.msra.mxu0 0
    %497 = vmatprep.subr.bf16.mxu0 0
    %498 = vmatpush1.bf16.msra.mxu0 0
    %499 = vmatprep.mubr.bf16.mxu0 0
    %500 = vmatmul.mubr.bf16.gmra.mrb[0].mxu0 %v465
    %v501 = vpop.f32.mrb[0].mxu0
    %v502 = vadd.f32 0.0, %v501
    %v503 = vpop.f32.mrb[0].mxu0
    %v504 = vpop.f32.mrb[0].mxu0
    %v505 = vpop.f32.mrb[0].mxu0
    %506 = vdwg.mxu0
    %v507 = vadd.f32 %v241, %v502
    %v508 = vxor.u32 %v507, 2147483648
    %v509 = vmul.f32 %v508, 1.442695
    %v510 = vpow.pop %v509
    %v511 = vadd.f32 %v510, 1.0
    %v512 = vrcp.pop %v511
    %v513 = vmul.f32 1.0, %v512
    %v514 = vtanh.pop %v507
    %v515 = vmul.f32 %v513, 0.0
    %517 = vrot.lane.b32.xlu0 %v514, 64
    %v518 = vpop.permute.xlu0 %517
    %v520 = vmul.f32 %v513, %v518
    %522 = vrot.lane.b32.xlu0 %v520, 32
    %v523 = vpop.permute.xlu0 %522
    %v525 = vadd.f32 %v515, %v523
    %v526 = vtanh.pop %v525
    %528 = vrot.lane.b32.xlu0 %v526, 64
    %v529 = vpop.permute.xlu0 %528
    %v531 = vmul.f32 %v513, %v529
    %v532 = vpack.c.bf16 %v531, %v531
    %534 = vrot.lane.b32.xlu0 %v532, 32
    %v535 = vpop.permute.xlu0 %534
    %v537 = vsel %vm170, %v535, 0
    %539 = vmatprep.subr.bf16.mxu0 0
    %540 = vmatpush1.bf16.msra.mxu0 %v462
    %541 = vmatprep.subr.bf16.mxu0 0
    %542 = vmatpush1.bf16.msra.mxu0 %v463
    %543 = vmatprep.subr.bf16.mxu0 0
    %544 = vmatpush1.bf16.msra.mxu0 0
    %545 = vmatprep.subr.bf16.mxu0 0
    %546 = vmatpush1.bf16.msra.mxu0 0
    %547 = vmatprep.subr.bf16.mxu0 0
    %548 = vmatpush1.bf16.msra.mxu0 0
    %549 = vmatprep.subr.bf16.mxu0 0
    %550 = vmatpush1.bf16.msra.mxu0 0
    %551 = vmatprep.subr.bf16.mxu0 0
    %552 = vmatpush1.bf16.msra.mxu0 0
    %553 = vmatprep.subr.bf16.mxu0 0
    %554 = vmatpush1.bf16.msra.mxu0 0
    %555 = vmatprep.subr.bf16.mxu0 0
    %556 = vmatpush1.bf16.msra.mxu0 0
    %557 = vmatprep.subr.bf16.mxu0 0
    %558 = vmatpush1.bf16.msra.mxu0 0
    %559 = vmatprep.subr.bf16.mxu0 0
    %560 = vmatpush1.bf16.msra.mxu0 0
    %561 = vmatprep.subr.bf16.mxu0 0
    %562 = vmatpush1.bf16.msra.mxu0 0
    %563 = vmatprep.subr.bf16.mxu0 0
    %564 = vmatpush1.bf16.msra.mxu0 0
    %565 = vmatprep.subr.bf16.mxu0 0
    %566 = vmatpush1.bf16.msra.mxu0 0
    %567 = vmatprep.subr.bf16.mxu0 0
    %568 = vmatpush1.bf16.msra.mxu0 0
    %569 = vmatprep.subr.bf16.mxu0 0
    %570 = vmatpush1.bf16.msra.mxu0 0
    %571 = vmatprep.mubr.bf16.mxu0 0
    %572 = vmatmul.mubr.bf16.gmra.mrb[0].mxu0 %v537
    %v573 = vpop.f32.mrb[0].mxu0
    %v574 = vadd.f32 0.0, %v573
    %v575 = vpop.f32.mrb[0].mxu0
    %v576 = vpop.f32.mrb[0].mxu0
    %v577 = vpop.f32.mrb[0].mxu0
    %578 = vdwg.mxu0
    %v579 = vadd.f32 %v243, %v574
    %v580 = vxor.u32 %v579, 2147483648
    %v581 = vmul.f32 %v580, 1.442695
    %v582 = vpow.pop %v581
    %v583 = vadd.f32 %v582, 1.0
    %v584 = vrcp.pop %v583
    %v585 = vmul.f32 1.0, %v584
    %v586 = vtanh.pop %v579
    %v587 = vmul.f32 %v585, %v525
    %589 = vrot.lane.b32.xlu0 %v586, 64
    %v590 = vpop.permute.xlu0 %589
    %v592 = vmul.f32 %v585, %v590
    %594 = vrot.lane.b32.xlu0 %v592, 32
    %v595 = vpop.permute.xlu0 %594
    %v597 = vadd.f32 %v587, %v595
    %v598 = vtanh.pop %v597
    %600 = vrot.lane.b32.xlu0 %v598, 64
    %v601 = vpop.permute.xlu0 %600
    %v603 = vmul.f32 %v585, %v601
    %v604 = vpack.c.bf16 %v603, %v603
    %606 = vrot.lane.b32.xlu0 %v604, 32
    %v607 = vpop.permute.xlu0 %606
    %v609 = vsel %vm170, %v607, 0
    %611 = vmatprep.subr.bf16.mxu0 0
    %612 = vmatpush1.bf16.msra.mxu0 %v462
    %613 = vmatprep.subr.bf16.mxu0 0
    %614 = vmatpush1.bf16.msra.mxu0 %v463
    %615 = vmatprep.subr.bf16.mxu0 0
    %616 = vmatpush1.bf16.msra.mxu0 0
    %617 = vmatprep.subr.bf16.mxu0 0
    %618 = vmatpush1.bf16.msra.mxu0 0
    %619 = vmatprep.subr.bf16.mxu0 0
    %620 = vmatpush1.bf16.msra.mxu0 0
    %621 = vmatprep.subr.bf16.mxu0 0
    %622 = vmatpush1.bf16.msra.mxu0 0
    %623 = vmatprep.subr.bf16.mxu0 0
    %624 = vmatpush1.bf16.msra.mxu0 0
    %625 = vmatprep.subr.bf16.mxu0 0
    %626 = vmatpush1.bf16.msra.mxu0 0
    %627 = vmatprep.subr.bf16.mxu0 0
    %628 = vmatpush1.bf16.msra.mxu0 0
    %629 = vmatprep.subr.bf16.mxu0 0
    %630 = vmatpush1.bf16.msra.mxu0 0
    %631 = vmatprep.subr.bf16.mxu0 0
    %632 = vmatpush1.bf16.msra.mxu0 0
    %633 = vmatprep.subr.bf16.mxu0 0
    %634 = vmatpush1.bf16.msra.mxu0 0
    %635 = vmatprep.subr.bf16.mxu0 0
    %636 = vmatpush1.bf16.msra.mxu0 0
    %637 = vmatprep.subr.bf16.mxu0 0
    %638 = vmatpush1.bf16.msra.mxu0 0
    %639 = vmatprep.subr.bf16.mxu0 0
    %640 = vmatpush1.bf16.msra.mxu0 0
    %641 = vmatprep.subr.bf16.mxu0 0
    %642 = vmatpush1.bf16.msra.mxu0 0
    %643 = vmatprep.mubr.bf16.mxu0 0
    %644 = vmatmul.mubr.bf16.gmra.mrb[0].mxu0 %v609
    %v645 = vpop.f32.mrb[0].mxu0
    %v646 = vadd.f32 0.0, %v645
    %v647 = vpop.f32.mrb[0].mxu0
    %v648 = vpop.f32.mrb[0].mxu0
    %v649 = vpop.f32.mrb[0].mxu0
    %650 = vdwg.mxu0
    %v651 = vadd.f32 %v312, %v646
    %v652 = vxor.u32 %v651, 2147483648
    %v653 = vmul.f32 %v652, 1.442695
    %v654 = vpow.pop %v653
    %v655 = vadd.f32 %v654, 1.0
    %v656 = vrcp.pop %v655
    %v657 = vmul.f32 1.0, %v656
    %v658 = vtanh.pop %v651
    %v659 = vmul.f32 %v657, %v597
    %661 = vrot.lane.b32.xlu0 %v658, 64
    %v662 = vpop.permute.xlu0 %661
    %v664 = vmul.f32 %v657, %v662
    %666 = vrot.lane.b32.xlu0 %v664, 32
    %v667 = vpop.permute.xlu0 %666
    %v669 = vadd.f32 %v659, %v667
    %v670 = vtanh.pop %v669
    %672 = vrot.lane.b32.xlu0 %v670, 64
    %v673 = vpop.permute.xlu0 %672
    %v675 = vmul.f32 %v657, %v673
    %v676 = vpack.c.bf16 %v675, %v675
    %678 = vrot.lane.b32.xlu0 %v676, 32
    %v679 = vpop.permute.xlu0 %678
    %v681 = vsel %vm170, %v679, 0
    %683 = vmatprep.subr.bf16.mxu0 0
    %684 = vmatpush1.bf16.msra.mxu0 %v462
    %685 = vmatprep.subr.bf16.mxu0 0
    %686 = vmatpush1.bf16.msra.mxu0 %v463
    %687 = vmatprep.subr.bf16.mxu0 0
    %688 = vmatpush1.bf16.msra.mxu0 0
    %689 = vmatprep.subr.bf16.mxu0 0
    %690 = vmatpush1.bf16.msra.mxu0 0
    %691 = vmatprep.subr.bf16.mxu0 0
    %692 = vmatpush1.bf16.msra.mxu0 0
    %693 = vmatprep.subr.bf16.mxu0 0
    %694 = vmatpush1.bf16.msra.mxu0 0
    %695 = vmatprep.subr.bf16.mxu0 0
    %696 = vmatpush1.bf16.msra.mxu0 0
    %697 = vmatprep.subr.bf16.mxu0 0
    %698 = vmatpush1.bf16.msra.mxu0 0
    %699 = vmatprep.subr.bf16.mxu0 0
    %700 = vmatpush1.bf16.msra.mxu0 0
    %701 = vmatprep.subr.bf16.mxu0 0
    %702 = vmatpush1.bf16.msra.mxu0 0
    %703 = vmatprep.subr.bf16.mxu0 0
    %704 = vmatpush1.bf16.msra.mxu0 0
    %705 = vmatprep.subr.bf16.mxu0 0
    %706 = vmatpush1.bf16.msra.mxu0 0
    %707 = vmatprep.subr.bf16.mxu0 0
    %708 = vmatpush1.bf16.msra.mxu0 0
    %709 = vmatprep.subr.bf16.mxu0 0
    %710 = vmatpush1.bf16.msra.mxu0 0
    %711 = vmatprep.subr.bf16.mxu0 0
    %712 = vmatpush1.bf16.msra.mxu0 0
    %713 = vmatprep.subr.bf16.mxu0 0
    %714 = vmatpush1.bf16.msra.mxu0 0
    %715 = vmatprep.mubr.bf16.mxu0 0
    %716 = vmatmul.mubr.bf16.gmra.mrb[0].mxu0 %v681
    %v717 = vpop.f32.mrb[0].mxu0
    %v718 = vadd.f32 0.0, %v717
    %v719 = vpop.f32.mrb[0].mxu0
    %v720 = vpop.f32.mrb[0].mxu0
    %v721 = vpop.f32.mrb[0].mxu0
    %722 = vdwg.mxu0
    %v723 = vadd.f32 %v314, %v718
    %v724 = vxor.u32 %v723, 2147483648
    %v725 = vmul.f32 %v724, 1.442695
    %v726 = vpow.pop %v725
    %v727 = vadd.f32 %v726, 1.0
    %v728 = vrcp.pop %v727
    %v729 = vmul.f32 1.0, %v728
    %v730 = vtanh.pop %v723
    %v731 = vmul.f32 %v729, %v669
    %733 = vrot.lane.b32.xlu0 %v730, 64
    %v734 = vpop.permute.xlu0 %733
    %v736 = vmul.f32 %v729, %v734
    %738 = vrot.lane.b32.xlu0 %v736, 32
    %v739 = vpop.permute.xlu0 %738
    %v741 = vadd.f32 %v731, %v739
    %v742 = vtanh.pop %v741
    %744 = vrot.lane.b32.xlu0 %v742, 64
    %v745 = vpop.permute.xlu0 %744
    %v747 = vmul.f32 %v729, %v745
    %v748 = vpack.c.bf16 %v747, %v747
    %750 = vrot.lane.b32.xlu0 %v748, 32
    %v751 = vpop.permute.xlu0 %750
    %v753 = vsel %vm170, %v751, 0
    %755 = vmatprep.subr.bf16.mxu0 0
    %756 = vmatpush1.bf16.msra.mxu0 %v462
    %757 = vmatprep.subr.bf16.mxu0 0
    %758 = vmatpush1.bf16.msra.mxu0 %v463
    %759 = vmatprep.subr.bf16.mxu0 0
    %760 = vmatpush1.bf16.msra.mxu0 0
    %761 = vmatprep.subr.bf16.mxu0 0
    %762 = vmatpush1.bf16.msra.mxu0 0
    %763 = vmatprep.subr.bf16.mxu0 0
    %764 = vmatpush1.bf16.msra.mxu0 0
    %765 = vmatprep.subr.bf16.mxu0 0
    %766 = vmatpush1.bf16.msra.mxu0 0
    %767 = vmatprep.subr.bf16.mxu0 0
    %768 = vmatpush1.bf16.msra.mxu0 0
    %769 = vmatprep.subr.bf16.mxu0 0
    %770 = vmatpush1.bf16.msra.mxu0 0
    %771 = vmatprep.subr.bf16.mxu0 0
    %772 = vmatpush1.bf16.msra.mxu0 0
    %773 = vmatprep.subr.bf16.mxu0 0
    %774 = vmatpush1.bf16.msra.mxu0 0
    %775 = vmatprep.subr.bf16.mxu0 0
    %776 = vmatpush1.bf16.msra.mxu0 0
    %777 = vmatprep.subr.bf16.mxu0 0
    %778 = vmatpush1.bf16.msra.mxu0 0
    %779 = vmatprep.subr.bf16.mxu0 0
    %780 = vmatpush1.bf16.msra.mxu0 0
    %781 = vmatprep.subr.bf16.mxu0 0
    %782 = vmatpush1.bf16.msra.mxu0 0
    %783 = vmatprep.subr.bf16.mxu0 0
    %784 = vmatpush1.bf16.msra.mxu0 0
    %785 = vmatprep.subr.bf16.mxu0 0
    %786 = vmatpush1.bf16.msra.mxu0 0
    %787 = vmatprep.mubr.bf16.mxu0 0
    %788 = vmatmul.mubr.bf16.gmra.mrb[0].mxu0 %v753
    %v789 = vpop.f32.mrb[0].mxu0
    %v790 = vadd.f32 0.0, %v789
    %v791 = vpop.f32.mrb[0].mxu0
    %v792 = vpop.f32.mrb[0].mxu0
    %v793 = vpop.f32.mrb[0].mxu0
    %794 = vdwg.mxu0
    %v795 = vadd.f32 %v383, %v790
    %v796 = vxor.u32 %v795, 2147483648
    %v797 = vmul.f32 %v796, 1.442695
    %v798 = vpow.pop %v797
    %v799 = vadd.f32 %v798, 1.0
    %v800 = vrcp.pop %v799
    %v801 = vmul.f32 1.0, %v800
    %v802 = vtanh.pop %v795
    %v803 = vmul.f32 %v801, %v741
    %805 = vrot.lane.b32.xlu0 %v802, 64
    %v806 = vpop.permute.xlu0 %805
    %v808 = vmul.f32 %v801, %v806
    %810 = vrot.lane.b32.xlu0 %v808, 32
    %v811 = vpop.permute.xlu0 %810
    %v813 = vadd.f32 %v803, %v811
    %v814 = vtanh.pop %v813
    %816 = vrot.lane.b32.xlu0 %v814, 64
    %v817 = vpop.permute.xlu0 %816
    %v819 = vmul.f32 %v801, %v817
    %v820 = vpack.c.bf16 %v819, %v819
    %822 = vrot.lane.b32.xlu0 %v820, 32
    %v823 = vpop.permute.xlu0 %822
    %v825 = vsel %vm170, %v823, 0
    %827 = vmatprep.subr.bf16.mxu0 0
    %828 = vmatpush1.bf16.msra.mxu0 %v462
    %829 = vmatprep.subr.bf16.mxu0 0
    %830 = vmatpush1.bf16.msra.mxu0 %v463
    %831 = vmatprep.subr.bf16.mxu0 0
    %832 = vmatpush1.bf16.msra.mxu0 0
    %833 = vmatprep.subr.bf16.mxu0 0
    %834 = vmatpush1.bf16.msra.mxu0 0
    %835 = vmatprep.subr.bf16.mxu0 0
    %836 = vmatpush1.bf16.msra.mxu0 0
    %837 = vmatprep.subr.bf16.mxu0 0
    %838 = vmatpush1.bf16.msra.mxu0 0
    %839 = vmatprep.subr.bf16.mxu0 0
    %840 = vmatpush1.bf16.msra.mxu0 0
    %841 = vmatprep.subr.bf16.mxu0 0
    %842 = vmatpush1.bf16.msra.mxu0 0
    %843 = vmatprep.subr.bf16.mxu0 0
    %844 = vmatpush1.bf16.msra.mxu0 0
    %845 = vmatprep.subr.bf16.mxu0 0
    %846 = vmatpush1.bf16.msra.mxu0 0
    %847 = vmatprep.subr.bf16.mxu0 0
    %848 = vmatpush1.bf16.msra.mxu0 0
    %849 = vmatprep.subr.bf16.mxu0 0
    %850 = vmatpush1.bf16.msra.mxu0 0
    %851 = vmatprep.subr.bf16.mxu0 0
    %852 = vmatpush1.bf16.msra.mxu0 0
    %853 = vmatprep.subr.bf16.mxu0 0
    %854 = vmatpush1.bf16.msra.mxu0 0
    %855 = vmatprep.subr.bf16.mxu0 0
    %856 = vmatpush1.bf16.msra.mxu0 0
    %857 = vmatprep.subr.bf16.mxu0 0
    %858 = vmatpush1.bf16.msra.mxu0 0
    %859 = vmatprep.mubr.bf16.mxu0 0
    %860 = vmatmul.mubr.bf16.gmra.mrb[0].mxu0 %v825
    %v861 = vpop.f32.mrb[0].mxu0
    %v862 = vadd.f32 0.0, %v861
    %v863 = vpop.f32.mrb[0].mxu0
    %v864 = vpop.f32.mrb[0].mxu0
    %v865 = vpop.f32.mrb[0].mxu0
    %866 = vdwg.mxu0
    %v867 = vadd.f32 %v385, %v862
    %v868 = vxor.u32 %v867, 2147483648
    %v869 = vmul.f32 %v868, 1.442695
    %v870 = vpow.pop %v869
    %v871 = vadd.f32 %v870, 1.0
    %v872 = vrcp.pop %v871
    %v873 = vmul.f32 1.0, %v872
    %v874 = vtanh.pop %v867
    %v875 = vmul.f32 %v873, %v813
    %877 = vrot.lane.b32.xlu0 %v874, 64
    %v878 = vpop.permute.xlu0 %877
    %v880 = vmul.f32 %v873, %v878
    %882 = vrot.lane.b32.xlu0 %v880, 32
    %v883 = vpop.permute.xlu0 %882
    %v885 = vadd.f32 %v875, %v883
    %v886 = vtanh.pop %v885
    %888 = vrot.lane.b32.xlu0 %v886, 64
    %v889 = vpop.permute.xlu0 %888
    %v891 = vmul.f32 %v873, %v889
    %v892 = vpack.c.bf16 %v891, %v891
    %894 = vrot.lane.b32.xlu0 %v892, 32
    %v895 = vpop.permute.xlu0 %894
    %v897 = vsel %vm170, %v895, 0
    %899 = vmatprep.subr.bf16.mxu0 0
    %900 = vmatpush1.bf16.msra.mxu0 %v462
    %901 = vmatprep.subr.bf16.mxu0 0
    %902 = vmatpush1.bf16.msra.mxu0 %v463
    %903 = vmatprep.subr.bf16.mxu0 0
    %904 = vmatpush1.bf16.msra.mxu0 0
    %905 = vmatprep.subr.bf16.mxu0 0
    %906 = vmatpush1.bf16.msra.mxu0 0
    %907 = vmatprep.subr.bf16.mxu0 0
    %908 = vmatpush1.bf16.msra.mxu0 0
    %909 = vmatprep.subr.bf16.mxu0 0
    %910 = vmatpush1.bf16.msra.mxu0 0
    %911 = vmatprep.subr.bf16.mxu0 0
    %912 = vmatpush1.bf16.msra.mxu0 0
    %913 = vmatprep.subr.bf16.mxu0 0
    %914 = vmatpush1.bf16.msra.mxu0 0
    %915 = vmatprep.subr.bf16.mxu0 0
    %916 = vmatpush1.bf16.msra.mxu0 0
    %917 = vmatprep.subr.bf16.mxu0 0
    %918 = vmatpush1.bf16.msra.mxu0 0
    %919 = vmatprep.subr.bf16.mxu0 0
    %920 = vmatpush1.bf16.msra.mxu0 0
    %921 = vmatprep.subr.bf16.mxu0 0
    %922 = vmatpush1.bf16.msra.mxu0 0
    %923 = vmatprep.subr.bf16.mxu0 0
    %924 = vmatpush1.bf16.msra.mxu0 0
    %925 = vmatprep.subr.bf16.mxu0 0
    %926 = vmatpush1.bf16.msra.mxu0 0
    %927 = vmatprep.subr.bf16.mxu0 0
    %928 = vmatpush1.bf16.msra.mxu0 0
    %929 = vmatprep.subr.bf16.mxu0 0
    %930 = vmatpush1.bf16.msra.mxu0 0
    %931 = vmatprep.mubr.bf16.mxu0 0
    %932 = vmatmul.mubr.bf16.gmra.mrb[0].mxu0 %v897
    %v933 = vpop.f32.mrb[0].mxu0
    %v934 = vadd.f32 0.0, %v933
    %v935 = vpop.f32.mrb[0].mxu0
    %v936 = vpop.f32.mrb[0].mxu0
    %v937 = vpop.f32.mrb[0].mxu0
    %938 = vdwg.mxu0
    %v939 = vadd.f32 %v454, %v934
    %v940 = vxor.u32 %v939, 2147483648
    %v941 = vmul.f32 %v940, 1.442695
    %v942 = vpow.pop %v941
    %v943 = vadd.f32 %v942, 1.0
    %v944 = vrcp.pop %v943
    %v945 = vmul.f32 1.0, %v944
    %v946 = vtanh.pop %v939
    %v947 = vmul.f32 %v945, %v885
    %949 = vrot.lane.b32.xlu0 %v946, 64
    %v950 = vpop.permute.xlu0 %949
    %v952 = vmul.f32 %v945, %v950
    %954 = vrot.lane.b32.xlu0 %v952, 32
    %v955 = vpop.permute.xlu0 %954
    %v957 = vadd.f32 %v947, %v955
    %v958 = vtanh.pop %v957
    %960 = vrot.lane.b32.xlu0 %v958, 64
    %v961 = vpop.permute.xlu0 %960
    %v963 = vmul.f32 %v945, %v961
    %v964 = vpack.c.bf16 %v963, %v963
    %966 = vrot.lane.b32.xlu0 %v964, 32
    %v967 = vpop.permute.xlu0 %966
    %v969 = vsel %vm170, %v967, 0
    %971 = vmatprep.subr.bf16.mxu0 0
    %972 = vmatpush1.bf16.msra.mxu0 %v462
    %973 = vmatprep.subr.bf16.mxu0 0
    %974 = vmatpush1.bf16.msra.mxu0 %v463
    %975 = vmatprep.subr.bf16.mxu0 0
    %976 = vmatpush1.bf16.msra.mxu0 0
    %977 = vmatprep.subr.bf16.mxu0 0
    %978 = vmatpush1.bf16.msra.mxu0 0
    %979 = vmatprep.subr.bf16.mxu0 0
    %980 = vmatpush1.bf16.msra.mxu0 0
    %981 = vmatprep.subr.bf16.mxu0 0
    %982 = vmatpush1.bf16.msra.mxu0 0
    %983 = vmatprep.subr.bf16.mxu0 0
    %984 = vmatpush1.bf16.msra.mxu0 0
    %985 = vmatprep.subr.bf16.mxu0 0
    %986 = vmatpush1.bf16.msra.mxu0 0
    %987 = vmatprep.subr.bf16.mxu0 0
    %988 = vmatpush1.bf16.msra.mxu0 0
    %989 = vmatprep.subr.bf16.mxu0 0
    %990 = vmatpush1.bf16.msra.mxu0 0
    %991 = vmatprep.subr.bf16.mxu0 0
    %992 = vmatpush1.bf16.msra.mxu0 0
    %993 = vmatprep.subr.bf16.mxu0 0
    %994 = vmatpush1.bf16.msra.mxu0 0
    %995 = vmatprep.subr.bf16.mxu0 0
    %996 = vmatpush1.bf16.msra.mxu0 0
    %997 = vmatprep.subr.bf16.mxu0 0
    %998 = vmatpush1.bf16.msra.mxu0 0
    %999 = vmatprep.subr.bf16.mxu0 0
    %1000 = vmatpush1.bf16.msra.mxu0 0
    %1001 = vmatprep.subr.bf16.mxu0 0
    %1002 = vmatpush1.bf16.msra.mxu0 0
    %1003 = vmatprep.mubr.bf16.mxu0 0
    %1004 = vmatmul.mubr.bf16.gmra.mrb[0].mxu0 %v969
    %v1005 = vpop.f32.mrb[0].mxu0
    %v1006 = vadd.f32 0.0, %v1005
    %v1007 = vpop.f32.mrb[0].mxu0
    %v1008 = vpop.f32.mrb[0].mxu0
    %v1009 = vpop.f32.mrb[0].mxu0
    %1010 = vdwg.mxu0
    %v1011 = vadd.f32 %v456, %v1006
    %v1012 = vxor.u32 %v1011, 2147483648
    %v1013 = vmul.f32 %v1012, 1.442695
    %v1014 = vpow.pop %v1013
    %v1015 = vadd.f32 %v1014, 1.0
    %v1016 = vrcp.pop %v1015
    %v1017 = vmul.f32 1.0, %v1016
    %v1018 = vtanh.pop %v1011
    %v1019 = vmul.f32 %v1017, %v957
    %1021 = vrot.lane.b32.xlu0 %v1018, 64
    %v1022 = vpop.permute.xlu0 %1021
    %v1024 = vmul.f32 %v1017, %v1022
    %1026 = vrot.lane.b32.xlu0 %v1024, 32
    %v1027 = vpop.permute.xlu0 %1026
    %v1029 = vadd.f32 %v1019, %v1027
    %v1030 = vtanh.pop %v1029
    %1032 = vrot.lane.b32.xlu0 %v1030, 64
    %v1033 = vpop.permute.xlu0 %1032
    %v1035 = vmul.f32 %v1017, %v1033
    %v1036 = vld [vmem:[%s4] sm:$0xff]
    %v1037 = vld [vmem:[%s4 + $0x8] sm:$0xff]
    %v1038 = vld [vmem:[%s4 + $0x10] sm:$0xff]
    %v1039 = vld [vmem:[%s4 + $0x18] sm:$0xff]
    %v1040 = vld [vmem:[%s5] sm:$0x1]
    %v1042 = vlaneseq
    %v1043 = vshrl.u32 %v1042, 7
    %v1044 = vsub.s32 0, %v1043
    %v1045 = vrot.slane %v1040, %v1044
    %1048 = vrot.lane.b32.xlu0 %v1035, 32
    %v1049 = vpop.permute.xlu0 %1048
    %v1050 = vsel %vm170, %v1049, 0
    %1052 = vmatprep.subr.mxu0 0.0
    %1053 = vmatpush1.msra.mxu0 %v1036
    %1054 = vmatprep.subr.mxu0 0.0
    %1055 = vmatpush1.msra.mxu0 %v1037
    %1056 = vmatprep.subr.mxu0 0.0
    %1057 = vmatpush1.msra.mxu0 %v1038
    %1058 = vmatprep.subr.mxu0 0.0
    %1059 = vmatpush1.msra.mxu0 %v1039
    %1060 = vmatprep.subr.mxu0 0.0
    %1061 = vmatpush1.msra.mxu0 0.0
    %1062 = vmatprep.subr.mxu0 0.0
    %1063 = vmatpush1.msra.mxu0 0.0
    %1064 = vmatprep.subr.mxu0 0.0
    %1065 = vmatpush1.msra.mxu0 0.0
    %1066 = vmatprep.subr.mxu0 0.0
    %1067 = vmatpush1.msra.mxu0 0.0
    %1068 = vmatprep.subr.mxu0 0.0
    %1069 = vmatpush1.msra.mxu0 0.0
    %1070 = vmatprep.subr.mxu0 0.0
    %1071 = vmatpush1.msra.mxu0 0.0
    %1072 = vmatprep.subr.mxu0 0.0
    %1073 = vmatpush1.msra.mxu0 0.0
    %1074 = vmatprep.subr.mxu0 0.0
    %1075 = vmatpush1.msra.mxu0 0.0
    %1076 = vmatprep.subr.mxu0 0.0
    %1077 = vmatpush1.msra.mxu0 0.0
    %1078 = vmatprep.subr.mxu0 0.0
    %1079 = vmatpush1.msra.mxu0 0.0
    %1080 = vmatprep.subr.mxu0 0.0
    %1081 = vmatpush1.msra.mxu0 0.0
    %1082 = vmatprep.subr.mxu0 0.0
    %1083 = vmatpush1.msra.mxu0 0.0
    %1084 = vmatprep.subr.mxu0 0.0
    %1085 = vmatpush1.msra.mxu0 0.0
    %1086 = vmatprep.subr.mxu0 0.0
    %1087 = vmatpush1.msra.mxu0 0.0
    %1088 = vmatprep.subr.mxu0 0.0
    %1089 = vmatpush1.msra.mxu0 0.0
    %1090 = vmatprep.subr.mxu0 0.0
    %1091 = vmatpush1.msra.mxu0 0.0
    %1092 = vmatprep.subr.mxu0 0.0
    %1093 = vmatpush1.msra.mxu0 0.0
    %1094 = vmatprep.subr.mxu0 0.0
    %1095 = vmatpush1.msra.mxu0 0.0
    %1096 = vmatprep.subr.mxu0 0.0
    %1097 = vmatpush1.msra.mxu0 0.0
    %1098 = vmatprep.subr.mxu0 0.0
    %1099 = vmatpush1.msra.mxu0 0.0
    %1100 = vmatprep.subr.mxu0 0.0
    %1101 = vmatpush1.msra.mxu0 0.0
    %1102 = vmatprep.subr.mxu0 0.0
    %1103 = vmatpush1.msra.mxu0 0.0
    %1104 = vmatprep.subr.mxu0 0.0
    %1105 = vmatpush1.msra.mxu0 0.0
    %1106 = vmatprep.subr.mxu0 0.0
    %1107 = vmatpush1.msra.mxu0 0.0
    %1108 = vmatprep.subr.mxu0 0.0
    %1109 = vmatpush1.msra.mxu0 0.0
    %1110 = vmatprep.subr.mxu0 0.0
    %1111 = vmatpush1.msra.mxu0 0.0
    %1112 = vmatprep.subr.mxu0 0.0
    %1113 = vmatpush1.msra.mxu0 0.0
    %1114 = vmatprep.subr.mxu0 0.0
    %1115 = vmatpush1.msra.mxu0 0.0
    %1116 = vmatprep.mubr.f32.mxu0 0.0
    %1117 = vmatmul.mubr.f32.gmra.mrb[0].mxu0 %v1050
    %v1118 = vpop.f32.mrb[0].mxu0
    %v1119 = vadd.f32 %v1045, %v1118
    %v1120 = vpop.f32.mrb[0].mxu0
    %1121 = vdwg.mxu0
    %v1122 = vxor.u32 %v1119, 2147483648
    %v1123 = vmul.f32 %v1122, 1.442695
    %v1124 = vpow.pop %v1123
    %v1125 = vadd.f32 %v1124, 1.0
    %v1126 = vrcp.pop %v1125
    %v1127 = vmul.f32 1.0, %v1126
    %v1128 = vld [vmem:[%s6] sm:$0xff]
    %v1129 = vld [vmem:[%s6 + $0x8] sm:$0xff]
    %v1130 = vld [vmem:[#allocation6] sm:$0x1]
    %v1132 = vlaneseq
    %v1133 = vshrl.u32 %v1132, 7
    %v1134 = vsub.s32 0, %v1133
    %v1135 = vrot.slane %v1130, %v1134
    %vm1137 = vcmask 130048
    %v1139 = vsel %vm1137, %v1127, 0
    %1141 = vmatprep.subr.mxu0 0.0
    %1142 = vmatpush1.msra.mxu0 %v1128
    %1143 = vmatprep.subr.mxu0 0.0
    %1144 = vmatpush1.msra.mxu0 %v1129
    %1145 = vmatprep.subr.mxu0 0.0
    %1146 = vmatpush1.msra.mxu0 0.0
    %1147 = vmatprep.subr.mxu0 0.0
    %1148 = vmatpush1.msra.mxu0 0.0
    %1149 = vmatprep.subr.mxu0 0.0
    %1150 = vmatpush1.msra.mxu0 0.0
    %1151 = vmatprep.subr.mxu0 0.0
    %1152 = vmatpush1.msra.mxu0 0.0
    %1153 = vmatprep.subr.mxu0 0.0
    %1154 = vmatpush1.msra.mxu0 0.0
    %1155 = vmatprep.subr.mxu0 0.0
    %1156 = vmatpush1.msra.mxu0 0.0
    %1157 = vmatprep.subr.mxu0 0.0
    %1158 = vmatpush1.msra.mxu0 0.0
    %1159 = vmatprep.subr.mxu0 0.0
    %1160 = vmatpush1.msra.mxu0 0.0
    %1161 = vmatprep.subr.mxu0 0.0
    %1162 = vmatpush1.msra.mxu0 0.0
    %1163 = vmatprep.subr.mxu0 0.0
    %1164 = vmatpush1.msra.mxu0 0.0
    %1165 = vmatprep.subr.mxu0 0.0
    %1166 = vmatpush1.msra.mxu0 0.0
    %1167 = vmatprep.subr.mxu0 0.0
    %1168 = vmatpush1.msra.mxu0 0.0
    %1169 = vmatprep.subr.mxu0 0.0
    %1170 = vmatpush1.msra.mxu0 0.0
    %1171 = vmatprep.subr.mxu0 0.0
    %1172 = vmatpush1.msra.mxu0 0.0
    %1173 = vmatprep.subr.mxu0 0.0
    %1174 = vmatpush1.msra.mxu0 0.0
    %1175 = vmatprep.subr.mxu0 0.0
    %1176 = vmatpush1.msra.mxu0 0.0
    %1177 = vmatprep.subr.mxu0 0.0
    %1178 = vmatpush1.msra.mxu0 0.0
    %1179 = vmatprep.subr.mxu0 0.0
    %1180 = vmatpush1.msra.mxu0 0.0
    %1181 = vmatprep.subr.mxu0 0.0
    %1182 = vmatpush1.msra.mxu0 0.0
    %1183 = vmatprep.subr.mxu0 0.0
    %1184 = vmatpush1.msra.mxu0 0.0
    %1185 = vmatprep.subr.mxu0 0.0
    %1186 = vmatpush1.msra.mxu0 0.0
    %1187 = vmatprep.subr.mxu0 0.0
    %1188 = vmatpush1.msra.mxu0 0.0
    %1189 = vmatprep.subr.mxu0 0.0
    %1190 = vmatpush1.msra.mxu0 0.0
    %1191 = vmatprep.subr.mxu0 0.0
    %1192 = vmatpush1.msra.mxu0 0.0
    %1193 = vmatprep.subr.mxu0 0.0
    %1194 = vmatpush1.msra.mxu0 0.0
    %1195 = vmatprep.subr.mxu0 0.0
    %1196 = vmatpush1.msra.mxu0 0.0
    %1197 = vmatprep.subr.mxu0 0.0
    %1198 = vmatpush1.msra.mxu0 0.0
    %1199 = vmatprep.subr.mxu0 0.0
    %1200 = vmatpush1.msra.mxu0 0.0
    %1201 = vmatprep.subr.mxu0 0.0
    %1202 = vmatpush1.msra.mxu0 0.0
    %1203 = vmatprep.subr.mxu0 0.0
    %1204 = vmatpush1.msra.mxu0 0.0
    %1205 = vmatprep.mubr.f32.mxu0 0.0
    %1206 = vmatmul.mubr.f32.gmra.mrb[0].mxu0 %v1139
    %v1207 = vpop.f32.mrb[0].mxu0
    %v1208 = vadd.f32 %v1135, %v1207
    %v1209 = vpop.f32.mrb[0].mxu0
    %1210 = vdwg.mxu0
    %v1211 = vmax.f32 %v1208, 0.0
    %v1212 = vld [vmem:[%s8] sm:$0xff]
    %v1213 = vld [vmem:[%s8 + $0x8] sm:$0xff]
    %v1214 = vld [vmem:[%s8 + $0x10] sm:$0xff]
    %v1215 = vld [vmem:[%s8 + $0x18] sm:$0xff]
    %v1216 = vld [vmem:[#allocation9] sm:$0x1]
    %v1218 = vlaneseq
    %v1219 = vshrl.u32 %v1218, 7
    %v1220 = vsub.s32 0, %v1219
    %v1221 = vrot.slane %v1216, %v1220
    %v1224 = vsel %vm170, %v1211, 0
    %1226 = vmatprep.subr.mxu0 0.0
    %1227 = vmatpush1.msra.mxu0 %v1212
    %1228 = vmatprep.subr.mxu0 0.0
    %1229 = vmatpush1.msra.mxu0 %v1213
    %1230 = vmatprep.subr.mxu0 0.0
    %1231 = vmatpush1.msra.mxu0 %v1214
    %1232 = vmatprep.subr.mxu0 0.0
    %1233 = vmatpush1.msra.mxu0 %v1215
    %1234 = vmatprep.subr.mxu0 0.0
    %1235 = vmatpush1.msra.mxu0 0.0
    %1236 = vmatprep.subr.mxu0 0.0
    %1237 = vmatpush1.msra.mxu0 0.0
    %1238 = vmatprep.subr.mxu0 0.0
    %1239 = vmatpush1.msra.mxu0 0.0
    %1240 = vmatprep.subr.mxu0 0.0
    %1241 = vmatpush1.msra.mxu0 0.0
    %1242 = vmatprep.subr.mxu0 0.0
    %1243 = vmatpush1.msra.mxu0 0.0
    %1244 = vmatprep.subr.mxu0 0.0
    %1245 = vmatpush1.msra.mxu0 0.0
    %1246 = vmatprep.subr.mxu0 0.0
    %1247 = vmatpush1.msra.mxu0 0.0
    %1248 = vmatprep.subr.mxu0 0.0
    %1249 = vmatpush1.msra.mxu0 0.0
    %1250 = vmatprep.subr.mxu0 0.0
    %1251 = vmatpush1.msra.mxu0 0.0
    %1252 = vmatprep.subr.mxu0 0.0
    %1253 = vmatpush1.msra.mxu0 0.0
    %1254 = vmatprep.subr.mxu0 0.0
    %1255 = vmatpush1.msra.mxu0 0.0
    %1256 = vmatprep.subr.mxu0 0.0
    %1257 = vmatpush1.msra.mxu0 0.0
    %1258 = vmatprep.subr.mxu0 0.0
    %1259 = vmatpush1.msra.mxu0 0.0
    %1260 = vmatprep.subr.mxu0 0.0
    %1261 = vmatpush1.msra.mxu0 0.0
    %1262 = vmatprep.subr.mxu0 0.0
    %1263 = vmatpush1.msra.mxu0 0.0
    %1264 = vmatprep.subr.mxu0 0.0
    %1265 = vmatpush1.msra.mxu0 0.0
    %1266 = vmatprep.subr.mxu0 0.0
    %1267 = vmatpush1.msra.mxu0 0.0
    %1268 = vmatprep.subr.mxu0 0.0
    %1269 = vmatpush1.msra.mxu0 0.0
    %1270 = vmatprep.subr.mxu0 0.0
    %1271 = vmatpush1.msra.mxu0 0.0
    %1272 = vmatprep.subr.mxu0 0.0
    %1273 = vmatpush1.msra.mxu0 0.0
    %1274 = vmatprep.subr.mxu0 0.0
    %1275 = vmatpush1.msra.mxu0 0.0
    %1276 = vmatprep.subr.mxu0 0.0
    %1277 = vmatpush1.msra.mxu0 0.0
    %1278 = vmatprep.subr.mxu0 0.0
    %1279 = vmatpush1.msra.mxu0 0.0
    %1280 = vmatprep.subr.mxu0 0.0
    %1281 = vmatpush1.msra.mxu0 0.0
    %1282 = vmatprep.subr.mxu0 0.0
    %1283 = vmatpush1.msra.mxu0 0.0
    %1284 = vmatprep.subr.mxu0 0.0
    %1285 = vmatpush1.msra.mxu0 0.0
    %1286 = vmatprep.subr.mxu0 0.0
    %1287 = vmatpush1.msra.mxu0 0.0
    %1288 = vmatprep.subr.mxu0 0.0
    %1289 = vmatpush1.msra.mxu0 0.0
    %1290 = vmatprep.mubr.f32.mxu0 0.0
    %1291 = vmatmul.mubr.f32.gmra.mrb[0].mxu0 %v1224
    %v1292 = vpop.f32.mrb[0].mxu0
    %v1293 = vadd.f32 %v1221, %v1292
    %v1294 = vpop.f32.mrb[0].mxu0
    %1295 = vdwg.mxu0
    %v1296 = vld [vmem:[#allocation8] sm:$0xff]
    %v1297 = vld [vmem:[#allocation8 + $0x8] sm:$0xff]
    %v1298 = vld [vmem:[#allocation8 + $0x10] sm:$0xff]
    %v1299 = vld [vmem:[#allocation8 + $0x18] sm:$0xff]
    %v1300 = vpack.c.bf16 %v1297, %v1296
    %v1301 = vpack.c.bf16 %v1299, %v1298
    %1302 = vmatprep.subr.bf16.mxu0 0
    %1303 = vmatpush1.bf16.msra.mxu0 %v1300
    %1304 = vmatprep.subr.bf16.mxu0 0
    %1305 = vmatpush1.bf16.msra.mxu0 %v1301
    %1306 = vmatprep.subr.bf16.mxu0 0
    %1307 = vmatpush1.bf16.msra.mxu0 0
    %1308 = vmatprep.subr.bf16.mxu0 0
    %1309 = vmatpush1.bf16.msra.mxu0 0
    %1310 = vmatprep.subr.bf16.mxu0 0
    %1311 = vmatpush1.bf16.msra.mxu0 0
    %1312 = vmatprep.subr.bf16.mxu0 0
    %1313 = vmatpush1.bf16.msra.mxu0 0
    %1314 = vmatprep.subr.bf16.mxu0 0
    %1315 = vmatpush1.bf16.msra.mxu0 0
    %1316 = vmatprep.subr.bf16.mxu0 0
    %1317 = vmatpush1.bf16.msra.mxu0 0
    %1318 = vmatprep.subr.bf16.mxu0 0
    %1319 = vmatpush1.bf16.msra.mxu0 0
    %1320 = vmatprep.subr.bf16.mxu0 0
    %1321 = vmatpush1.bf16.msra.mxu0 0
    %1322 = vmatprep.subr.bf16.mxu0 0
    %1323 = vmatpush1.bf16.msra.mxu0 0
    %1324 = vmatprep.subr.bf16.mxu0 0
    %1325 = vmatpush1.bf16.msra.mxu0 0
    %1326 = vmatprep.subr.bf16.mxu0 0
    %1327 = vmatpush1.bf16.msra.mxu0 0
    %1328 = vmatprep.subr.bf16.mxu0 0
    %1329 = vmatpush1.bf16.msra.mxu0 0
    %1330 = vmatprep.subr.bf16.mxu0 0
    %1331 = vmatpush1.bf16.msra.mxu0 0
    %1332 = vmatprep.subr.bf16.mxu0 0
    %1333 = vmatpush1.bf16.msra.mxu0 0
    %1334 = vmatprep.mubr.bf16.mxu0 0
    %1335 = vmatmul.mubr.bf16.gmra.mrb[0].mxu0 %v465
    %v1336 = vpop.f32.mrb[0].mxu0
    %v1337 = vadd.f32 0.0, %v1336
    %v1338 = vpop.f32.mrb[0].mxu0
    %v1339 = vpop.f32.mrb[0].mxu0
    %v1340 = vpop.f32.mrb[0].mxu0
    %1341 = vdwg.mxu0
    %v1342 = vadd.f32 %v1293, %v1337
    %v1343 = vxor.u32 %v1342, 2147483648
    %v1344 = vmul.f32 %v1343, 1.442695
    %v1345 = vpow.pop %v1344
    %v1346 = vadd.f32 %v1345, 1.0
    %v1347 = vrcp.pop %v1346
    %v1348 = vmul.f32 1.0, %v1347
    %v1349 = vtanh.pop %v1342
    %v1350 = vmul.f32 %v1348, 0.0
    %1352 = vrot.lane.b32.xlu0 %v1349, 64
    %v1353 = vpop.permute.xlu0 %1352
    %v1355 = vmul.f32 %v1348, %v1353
    %1357 = vrot.lane.b32.xlu0 %v1355, 32
    %v1358 = vpop.permute.xlu0 %1357
    %v1360 = vadd.f32 %v1350, %v1358
    %v1361 = vtanh.pop %v1360
    %1363 = vrot.lane.b32.xlu0 %v1361, 64
    %v1364 = vpop.permute.xlu0 %1363
    %v1366 = vmul.f32 %v1348, %v1364
    %1368 = vrot.lane.b32.xlu0 %v1366, 32
    %v1369 = vpop.permute.xlu0 %1368
    %1371 = vst.msk [vmem:[#allocation2] sm:$0xff] %vm170, %v1369
    %v1372 = vpack.c.bf16 %v1366, %v1366
    %1374 = vrot.lane.b32.xlu0 %v1372, 32
    %v1375 = vpop.permute.xlu0 %1374
    %v1377 = vsel %vm170, %v1375, 0
    %1379 = vmatprep.subr.bf16.mxu0 0
    %1380 = vmatpush1.bf16.msra.mxu0 %v1300
    %1381 = vmatprep.subr.bf16.mxu0 0
    %1382 = vmatpush1.bf16.msra.mxu0 %v1301
    %1383 = vmatprep.subr.bf16.mxu0 0
    %1384 = vmatpush1.bf16.msra.mxu0 0
    %1385 = vmatprep.subr.bf16.mxu0 0
    %1386 = vmatpush1.bf16.msra.mxu0 0
    %1387 = vmatprep.subr.bf16.mxu0 0
    %1388 = vmatpush1.bf16.msra.mxu0 0
    %1389 = vmatprep.subr.bf16.mxu0 0
    %1390 = vmatpush1.bf16.msra.mxu0 0
    %1391 = vmatprep.subr.bf16.mxu0 0
    %1392 = vmatpush1.bf16.msra.mxu0 0
    %1393 = vmatprep.subr.bf16.mxu0 0
    %1394 = vmatpush1.bf16.msra.mxu0 0
    %1395 = vmatprep.subr.bf16.mxu0 0
    %1396 = vmatpush1.bf16.msra.mxu0 0
    %1397 = vmatprep.subr.bf16.mxu0 0
    %1398 = vmatpush1.bf16.msra.mxu0 0
    %1399 = vmatprep.subr.bf16.mxu0 0
    %1400 = vmatpush1.bf16.msra.mxu0 0
    %1401 = vmatprep.subr.bf16.mxu0 0
    %1402 = vmatpush1.bf16.msra.mxu0 0
    %1403 = vmatprep.subr.bf16.mxu0 0
    %1404 = vmatpush1.bf16.msra.mxu0 0
    %1405 = vmatprep.subr.bf16.mxu0 0
    %1406 = vmatpush1.bf16.msra.mxu0 0
    %1407 = vmatprep.subr.bf16.mxu0 0
    %1408 = vmatpush1.bf16.msra.mxu0 0
    %1409 = vmatprep.subr.bf16.mxu0 0
    %1410 = vmatpush1.bf16.msra.mxu0 0
    %1411 = vmatprep.mubr.bf16.mxu0 0
    %1412 = vmatmul.mubr.bf16.gmra.mrb[0].mxu0 %v1377
    %v1413 = vpop.f32.mrb[0].mxu0
    %v1414 = vadd.f32 0.0, %v1413
    %v1415 = vpop.f32.mrb[0].mxu0
    %v1416 = vpop.f32.mrb[0].mxu0
    %v1417 = vpop.f32.mrb[0].mxu0
    %1418 = vdwg.mxu0
    %v1419 = vadd.f32 %v1293, %v1414
    %v1420 = vxor.u32 %v1419, 2147483648
    %v1421 = vmul.f32 %v1420, 1.442695
    %v1422 = vpow.pop %v1421
    %v1423 = vadd.f32 %v1422, 1.0
    %v1424 = vrcp.pop %v1423
    %v1425 = vmul.f32 1.0, %v1424
    %v1426 = vtanh.pop %v1419
    %v1427 = vmul.f32 %v1425, %v1360
    %1429 = vrot.lane.b32.xlu0 %v1426, 64
    %v1430 = vpop.permute.xlu0 %1429
    %v1432 = vmul.f32 %v1425, %v1430
    %1434 = vrot.lane.b32.xlu0 %v1432, 32
    %v1435 = vpop.permute.xlu0 %1434
    %v1437 = vadd.f32 %v1427, %v1435
    %v1438 = vtanh.pop %v1437
    %1440 = vrot.lane.b32.xlu0 %v1438, 64
    %v1441 = vpop.permute.xlu0 %1440
    %v1443 = vmul.f32 %v1425, %v1441
    %1445 = vrot.lane.b32.xlu0 %v1443, 64
    %v1446 = vpop.permute.xlu0 %1445
    %vm1448 = vcmask 523520
    %1449 = vst.msk [vmem:[#allocation2] sm:$0xff] %vm1448, %v1446
    %v1450 = vpack.c.bf16 %v1443, %v1443
    %1452 = vrot.lane.b32.xlu0 %v1450, 32
    %v1453 = vpop.permute.xlu0 %1452
    %v1455 = vsel %vm170, %v1453, 0
    %1457 = vmatprep.subr.bf16.mxu0 0
    %1458 = vmatpush1.bf16.msra.mxu0 %v1300
    %1459 = vmatprep.subr.bf16.mxu0 0
    %1460 = vmatpush1.bf16.msra.mxu0 %v1301
    %1461 = vmatprep.subr.bf16.mxu0 0
    %1462 = vmatpush1.bf16.msra.mxu0 0
    %1463 = vmatprep.subr.bf16.mxu0 0
    %1464 = vmatpush1.bf16.msra.mxu0 0
    %1465 = vmatprep.subr.bf16.mxu0 0
    %1466 = vmatpush1.bf16.msra.mxu0 0
    %1467 = vmatprep.subr.bf16.mxu0 0
    %1468 = vmatpush1.bf16.msra.mxu0 0
    %1469 = vmatprep.subr.bf16.mxu0 0
    %1470 = vmatpush1.bf16.msra.mxu0 0
    %1471 = vmatprep.subr.bf16.mxu0 0
    %1472 = vmatpush1.bf16.msra.mxu0 0
    %1473 = vmatprep.subr.bf16.mxu0 0
    %1474 = vmatpush1.bf16.msra.mxu0 0
    %1475 = vmatprep.subr.bf16.mxu0 0
    %1476 = vmatpush1.bf16.msra.mxu0 0
    %1477 = vmatprep.subr.bf16.mxu0 0
    %1478 = vmatpush1.bf16.msra.mxu0 0
    %1479 = vmatprep.subr.bf16.mxu0 0
    %1480 = vmatpush1.bf16.msra.mxu0 0
    %1481 = vmatprep.subr.bf16.mxu0 0
    %1482 = vmatpush1.bf16.msra.mxu0 0
    %1483 = vmatprep.subr.bf16.mxu0 0
    %1484 = vmatpush1.bf16.msra.mxu0 0
    %1485 = vmatprep.subr.bf16.mxu0 0
    %1486 = vmatpush1.bf16.msra.mxu0 0
    %1487 = vmatprep.subr.bf16.mxu0 0
    %1488 = vmatpush1.bf16.msra.mxu0 0
    %1489 = vmatprep.mubr.bf16.mxu0 0
    %1490 = vmatmul.mubr.bf16.gmra.mrb[0].mxu0 %v1455
    %v1491 = vpop.f32.mrb[0].mxu0
    %v1492 = vadd.f32 0.0, %v1491
    %v1493 = vpop.f32.mrb[0].mxu0
    %v1494 = vpop.f32.mrb[0].mxu0
    %v1495 = vpop.f32.mrb[0].mxu0
    %1496 = vdwg.mxu0
    %v1497 = vadd.f32 %v1293, %v1492
    %v1498 = vxor.u32 %v1497, 2147483648
    %v1499 = vmul.f32 %v1498, 1.442695
    %v1500 = vpow.pop %v1499
    %v1501 = vadd.f32 %v1500, 1.0
    %v1502 = vrcp.pop %v1501
    %v1503 = vmul.f32 1.0, %v1502
    %v1504 = vtanh.pop %v1497
    %v1505 = vmul.f32 %v1503, %v1437
    %1507 = vrot.lane.b32.xlu0 %v1504, 64
    %v1508 = vpop.permute.xlu0 %1507
    %v1510 = vmul.f32 %v1503, %v1508
    %1512 = vrot.lane.b32.xlu0 %v1510, 32
    %v1513 = vpop.permute.xlu0 %1512
    %v1515 = vadd.f32 %v1505, %v1513
    %v1516 = vtanh.pop %v1515
    %1518 = vrot.lane.b32.xlu0 %v1516, 64
    %v1519 = vpop.permute.xlu0 %1518
    %v1521 = vmul.f32 %v1503, %v1519
    %1523 = vrot.lane.b32.xlu0 %v1521, 96
    %v1524 = vpop.permute.xlu0 %1523
    %vm1526 = vcmask 785920
    %1527 = vst.msk [vmem:[#allocation2] sm:$0xff] %vm1526, %v1524
    %v1528 = vpack.c.bf16 %v1521, %v1521
    %1530 = vrot.lane.b32.xlu0 %v1528, 32
    %v1531 = vpop.permute.xlu0 %1530
    %v1533 = vsel %vm170, %v1531, 0
    %1535 = vmatprep.subr.bf16.mxu0 0
    %1536 = vmatpush1.bf16.msra.mxu0 %v1300
    %1537 = vmatprep.subr.bf16.mxu0 0
    %1538 = vmatpush1.bf16.msra.mxu0 %v1301
    %1539 = vmatprep.subr.bf16.mxu0 0
    %1540 = vmatpush1.bf16.msra.mxu0 0
    %1541 = vmatprep.subr.bf16.mxu0 0
    %1542 = vmatpush1.bf16.msra.mxu0 0
    %1543 = vmatprep.subr.bf16.mxu0 0
    %1544 = vmatpush1.bf16.msra.mxu0 0
    %1545 = vmatprep.subr.bf16.mxu0 0
    %1546 = vmatpush1.bf16.msra.mxu0 0
    %1547 = vmatprep.subr.bf16.mxu0 0
    %1548 = vmatpush1.bf16.msra.mxu0 0
    %1549 = vmatprep.subr.bf16.mxu0 0
    %1550 = vmatpush1.bf16.msra.mxu0 0
    %1551 = vmatprep.subr.bf16.mxu0 0
    %1552 = vmatpush1.bf16.msra.mxu0 0
    %1553 = vmatprep.subr.bf16.mxu0 0
    %1554 = vmatpush1.bf16.msra.mxu0 0
    %1555 = vmatprep.subr.bf16.mxu0 0
    %1556 = vmatpush1.bf16.msra.mxu0 0
    %1557 = vmatprep.subr.bf16.mxu0 0
    %1558 = vmatpush1.bf16.msra.mxu0 0
    %1559 = vmatprep.subr.bf16.mxu0 0
    %1560 = vmatpush1.bf16.msra.mxu0 0
    %1561 = vmatprep.subr.bf16.mxu0 0
    %1562 = vmatpush1.bf16.msra.mxu0 0
    %1563 = vmatprep.subr.bf16.mxu0 0
    %1564 = vmatpush1.bf16.msra.mxu0 0
    %1565 = vmatprep.subr.bf16.mxu0 0
    %1566 = vmatpush1.bf16.msra.mxu0 0
    %1567 = vmatprep.mubr.bf16.mxu0 0
    %1568 = vmatmul.mubr.bf16.gmra.mrb[0].mxu0 %v1533
    %v1569 = vpop.f32.mrb[0].mxu0
    %v1570 = vadd.f32 0.0, %v1569
    %v1571 = vpop.f32.mrb[0].mxu0
    %v1572 = vpop.f32.mrb[0].mxu0
    %v1573 = vpop.f32.mrb[0].mxu0
    %1574 = vdwg.mxu0
    %v1575 = vadd.f32 %v1293, %v1570
    %v1576 = vxor.u32 %v1575, 2147483648
    %v1577 = vmul.f32 %v1576, 1.442695
    %v1578 = vpow.pop %v1577
    %v1579 = vadd.f32 %v1578, 1.0
    %v1580 = vrcp.pop %v1579
    %v1581 = vmul.f32 1.0, %v1580
    %v1582 = vtanh.pop %v1575
    %v1583 = vmul.f32 %v1581, %v1515
    %1585 = vrot.lane.b32.xlu0 %v1582, 64
    %v1586 = vpop.permute.xlu0 %1585
    %v1588 = vmul.f32 %v1581, %v1586
    %1590 = vrot.lane.b32.xlu0 %v1588, 32
    %v1591 = vpop.permute.xlu0 %1590
    %v1593 = vadd.f32 %v1583, %v1591
    %v1594 = vtanh.pop %v1593
    %1596 = vrot.lane.b32.xlu0 %v1594, 64
    %v1597 = vpop.permute.xlu0 %1596
    %v1599 = vmul.f32 %v1581, %v1597
    %vm1600 = vcmask 1048320
    %1601 = vst.msk [vmem:[#allocation2] sm:$0xff] %vm1600, %v1599
    %v1602 = vpack.c.bf16 %v1599, %v1599
    %1604 = vrot.lane.b32.xlu0 %v1602, 32
    %v1605 = vpop.permute.xlu0 %1604
    %v1607 = vsel %vm170, %v1605, 0
    %1609 = vmatprep.subr.bf16.mxu0 0
    %1610 = vmatpush1.bf16.msra.mxu0 %v1300
    %1611 = vmatprep.subr.bf16.mxu0 0
    %1612 = vmatpush1.bf16.msra.mxu0 %v1301
    %1613 = vmatprep.subr.bf16.mxu0 0
    %1614 = vmatpush1.bf16.msra.mxu0 0
    %1615 = vmatprep.subr.bf16.mxu0 0
    %1616 = vmatpush1.bf16.msra.mxu0 0
    %1617 = vmatprep.subr.bf16.mxu0 0
    %1618 = vmatpush1.bf16.msra.mxu0 0
    %1619 = vmatprep.subr.bf16.mxu0 0
    %1620 = vmatpush1.bf16.msra.mxu0 0
    %1621 = vmatprep.subr.bf16.mxu0 0
    %1622 = vmatpush1.bf16.msra.mxu0 0
    %1623 = vmatprep.subr.bf16.mxu0 0
    %1624 = vmatpush1.bf16.msra.mxu0 0
    %1625 = vmatprep.subr.bf16.mxu0 0
    %1626 = vmatpush1.bf16.msra.mxu0 0
    %1627 = vmatprep.subr.bf16.mxu0 0
    %1628 = vmatpush1.bf16.msra.mxu0 0
    %1629 = vmatprep.subr.bf16.mxu0 0
    %1630 = vmatpush1.bf16.msra.mxu0 0
    %1631 = vmatprep.subr.bf16.mxu0 0
    %1632 = vmatpush1.bf16.msra.mxu0 0
    %1633 = vmatprep.subr.bf16.mxu0 0
    %1634 = vmatpush1.bf16.msra.mxu0 0
    %1635 = vmatprep.subr.bf16.mxu0 0
    %1636 = vmatpush1.bf16.msra.mxu0 0
    %1637 = vmatprep.subr.bf16.mxu0 0
    %1638 = vmatpush1.bf16.msra.mxu0 0
    %1639 = vmatprep.subr.bf16.mxu0 0
    %1640 = vmatpush1.bf16.msra.mxu0 0
    %1641 = vmatprep.mubr.bf16.mxu0 0
    %1642 = vmatmul.mubr.bf16.gmra.mrb[0].mxu0 %v1607
    %v1643 = vpop.f32.mrb[0].mxu0
    %v1644 = vadd.f32 0.0, %v1643
    %v1645 = vpop.f32.mrb[0].mxu0
    %v1646 = vpop.f32.mrb[0].mxu0
    %v1647 = vpop.f32.mrb[0].mxu0
    %1648 = vdwg.mxu0
    %v1649 = vadd.f32 %v1293, %v1644
    %v1650 = vxor.u32 %v1649, 2147483648
    %v1651 = vmul.f32 %v1650, 1.442695
    %v1652 = vpow.pop %v1651
    %v1653 = vadd.f32 %v1652, 1.0
    %v1654 = vrcp.pop %v1653
    %v1655 = vmul.f32 1.0, %v1654
    %v1656 = vtanh.pop %v1649
    %v1657 = vmul.f32 %v1655, %v1593
    %1659 = vrot.lane.b32.xlu0 %v1656, 64
    %v1660 = vpop.permute.xlu0 %1659
    %v1662 = vmul.f32 %v1655, %v1660
    %1664 = vrot.lane.b32.xlu0 %v1662, 32
    %v1665 = vpop.permute.xlu0 %1664
    %v1667 = vadd.f32 %v1657, %v1665
    %v1668 = vtanh.pop %v1667
    %1670 = vrot.lane.b32.xlu0 %v1668, 64
    %v1671 = vpop.permute.xlu0 %1670
    %v1673 = vmul.f32 %v1655, %v1671
    %1675 = vrot.lane.b32.xlu0 %v1673, 32
    %v1676 = vpop.permute.xlu0 %1675
    %1678 = vst.msk [vmem:[#allocation2 + $0x8] sm:$0xff] %vm170, %v1676
    %v1679 = vpack.c.bf16 %v1673, %v1673
    %1681 = vrot.lane.b32.xlu0 %v1679, 32
    %v1682 = vpop.permute.xlu0 %1681
    %v1684 = vsel %vm170, %v1682, 0
    %1686 = vmatprep.subr.bf16.mxu0 0
    %1687 = vmatpush1.bf16.msra.mxu0 %v1300
    %1688 = vmatprep.subr.bf16.mxu0 0
    %1689 = vmatpush1.bf16.msra.mxu0 %v1301
    %1690 = vmatprep.subr.bf16.mxu0 0
    %1691 = vmatpush1.bf16.msra.mxu0 0
    %1692 = vmatprep.subr.bf16.mxu0 0
    %1693 = vmatpush1.bf16.msra.mxu0 0
    %1694 = vmatprep.subr.bf16.mxu0 0
    %1695 = vmatpush1.bf16.msra.mxu0 0
    %1696 = vmatprep.subr.bf16.mxu0 0
    %1697 = vmatpush1.bf16.msra.mxu0 0
    %1698 = vmatprep.subr.bf16.mxu0 0
    %1699 = vmatpush1.bf16.msra.mxu0 0
    %1700 = vmatprep.subr.bf16.mxu0 0
    %1701 = vmatpush1.bf16.msra.mxu0 0
    %1702 = vmatprep.subr.bf16.mxu0 0
    %1703 = vmatpush1.bf16.msra.mxu0 0
    %1704 = vmatprep.subr.bf16.mxu0 0
    %1705 = vmatpush1.bf16.msra.mxu0 0
    %1706 = vmatprep.subr.bf16.mxu0 0
    %1707 = vmatpush1.bf16.msra.mxu0 0
    %1708 = vmatprep.subr.bf16.mxu0 0
    %1709 = vmatpush1.bf16.msra.mxu0 0
    %1710 = vmatprep.subr.bf16.mxu0 0
    %1711 = vmatpush1.bf16.msra.mxu0 0
    %1712 = vmatprep.subr.bf16.mxu0 0
    %1713 = vmatpush1.bf16.msra.mxu0 0
    %1714 = vmatprep.subr.bf16.mxu0 0
    %1715 = vmatpush1.bf16.msra.mxu0 0
    %1716 = vmatprep.subr.bf16.mxu0 0
    %1717 = vmatpush1.bf16.msra.mxu0 0
    %1718 = vmatprep.mubr.bf16.mxu0 0
    %1719 = vmatmul.mubr.bf16.gmra.mrb[0].mxu0 %v1684
    %v1720 = vpop.f32.mrb[0].mxu0
    %v1721 = vadd.f32 0.0, %v1720
    %v1722 = vpop.f32.mrb[0].mxu0
    %v1723 = vpop.f32.mrb[0].mxu0
    %v1724 = vpop.f32.mrb[0].mxu0
    %1725 = vdwg.mxu0
    %v1726 = vadd.f32 %v1293, %v1721
    %v1727 = vxor.u32 %v1726, 2147483648
    %v1728 = vmul.f32 %v1727, 1.442695
    %v1729 = vpow.pop %v1728
    %v1730 = vadd.f32 %v1729, 1.0
    %v1731 = vrcp.pop %v1730
    %v1732 = vmul.f32 1.0, %v1731
    %v1733 = vtanh.pop %v1726
    %v1734 = vmul.f32 %v1732, %v1667
    %1736 = vrot.lane.b32.xlu0 %v1733, 64
    %v1737 = vpop.permute.xlu0 %1736
    %v1739 = vmul.f32 %v1732, %v1737
    %1741 = vrot.lane.b32.xlu0 %v1739, 32
    %v1742 = vpop.permute.xlu0 %1741
    %v1744 = vadd.f32 %v1734, %v1742
    %v1745 = vtanh.pop %v1744
    %1747 = vrot.lane.b32.xlu0 %v1745, 64
    %v1748 = vpop.permute.xlu0 %1747
    %v1750 = vmul.f32 %v1732, %v1748
    %1752 = vrot.lane.b32.xlu0 %v1750, 64
    %v1753 = vpop.permute.xlu0 %1752
    %1755 = vst.msk [vmem:[#allocation2 + $0x8] sm:$0xff] %vm1448, %v1753
    %v1756 = vpack.c.bf16 %v1750, %v1750
    %1758 = vrot.lane.b32.xlu0 %v1756, 32
    %v1759 = vpop.permute.xlu0 %1758
    %v1761 = vsel %vm170, %v1759, 0
    %1763 = vmatprep.subr.bf16.mxu0 0
    %1764 = vmatpush1.bf16.msra.mxu0 %v1300
    %1765 = vmatprep.subr.bf16.mxu0 0
    %1766 = vmatpush1.bf16.msra.mxu0 %v1301
    %1767 = vmatprep.subr.bf16.mxu0 0
    %1768 = vmatpush1.bf16.msra.mxu0 0
    %1769 = vmatprep.subr.bf16.mxu0 0
    %1770 = vmatpush1.bf16.msra.mxu0 0
    %1771 = vmatprep.subr.bf16.mxu0 0
    %1772 = vmatpush1.bf16.msra.mxu0 0
    %1773 = vmatprep.subr.bf16.mxu0 0
    %1774 = vmatpush1.bf16.msra.mxu0 0
    %1775 = vmatprep.subr.bf16.mxu0 0
    %1776 = vmatpush1.bf16.msra.mxu0 0
    %1777 = vmatprep.subr.bf16.mxu0 0
    %1778 = vmatpush1.bf16.msra.mxu0 0
    %1779 = vmatprep.subr.bf16.mxu0 0
    %1780 = vmatpush1.bf16.msra.mxu0 0
    %1781 = vmatprep.subr.bf16.mxu0 0
    %1782 = vmatpush1.bf16.msra.mxu0 0
    %1783 = vmatprep.subr.bf16.mxu0 0
    %1784 = vmatpush1.bf16.msra.mxu0 0
    %1785 = vmatprep.subr.bf16.mxu0 0
    %1786 = vmatpush1.bf16.msra.mxu0 0
    %1787 = vmatprep.subr.bf16.mxu0 0
    %1788 = vmatpush1.bf16.msra.mxu0 0
    %1789 = vmatprep.subr.bf16.mxu0 0
    %1790 = vmatpush1.bf16.msra.mxu0 0
    %1791 = vmatprep.subr.bf16.mxu0 0
    %1792 = vmatpush1.bf16.msra.mxu0 0
    %1793 = vmatprep.subr.bf16.mxu0 0
    %1794 = vmatpush1.bf16.msra.mxu0 0
    %1795 = vmatprep.mubr.bf16.mxu0 0
    %1796 = vmatmul.mubr.bf16.gmra.mrb[0].mxu0 %v1761
    %v1797 = vpop.f32.mrb[0].mxu0
    %v1798 = vadd.f32 0.0, %v1797
    %v1799 = vpop.f32.mrb[0].mxu0
    %v1800 = vpop.f32.mrb[0].mxu0
    %v1801 = vpop.f32.mrb[0].mxu0
    %1802 = vdwg.mxu0
    %v1803 = vadd.f32 %v1293, %v1798
    %v1804 = vxor.u32 %v1803, 2147483648
    %v1805 = vmul.f32 %v1804, 1.442695
    %v1806 = vpow.pop %v1805
    %v1807 = vadd.f32 %v1806, 1.0
    %v1808 = vrcp.pop %v1807
    %v1809 = vmul.f32 1.0, %v1808
    %v1810 = vtanh.pop %v1803
    %v1811 = vmul.f32 %v1809, %v1744
    %1813 = vrot.lane.b32.xlu0 %v1810, 64
    %v1814 = vpop.permute.xlu0 %1813
    %v1816 = vmul.f32 %v1809, %v1814
    %1818 = vrot.lane.b32.xlu0 %v1816, 32
    %v1819 = vpop.permute.xlu0 %1818
    %v1821 = vadd.f32 %v1811, %v1819
    %v1822 = vtanh.pop %v1821
    %1824 = vrot.lane.b32.xlu0 %v1822, 64
    %v1825 = vpop.permute.xlu0 %1824
    %v1827 = vmul.f32 %v1809, %v1825
    %1829 = vrot.lane.b32.xlu0 %v1827, 96
    %v1830 = vpop.permute.xlu0 %1829
    %1832 = vst.msk [vmem:[#allocation2 + $0x8] sm:$0xff] %vm1526, %v1830
    %v1833 = vpack.c.bf16 %v1827, %v1827
    %1835 = vrot.lane.b32.xlu0 %v1833, 32
    %v1836 = vpop.permute.xlu0 %1835
    %v1838 = vsel %vm170, %v1836, 0
    %1840 = vmatprep.subr.bf16.mxu0 0
    %1841 = vmatpush1.bf16.msra.mxu0 %v1300
    %1842 = vmatprep.subr.bf16.mxu0 0
    %1843 = vmatpush1.bf16.msra.mxu0 %v1301
    %1844 = vmatprep.subr.bf16.mxu0 0
    %1845 = vmatpush1.bf16.msra.mxu0 0
    %1846 = vmatprep.subr.bf16.mxu0 0
    %1847 = vmatpush1.bf16.msra.mxu0 0
    %1848 = vmatprep.subr.bf16.mxu0 0
    %1849 = vmatpush1.bf16.msra.mxu0 0
    %1850 = vmatprep.subr.bf16.mxu0 0
    %1851 = vmatpush1.bf16.msra.mxu0 0
    %1852 = vmatprep.subr.bf16.mxu0 0
    %1853 = vmatpush1.bf16.msra.mxu0 0
    %1854 = vmatprep.subr.bf16.mxu0 0
    %1855 = vmatpush1.bf16.msra.mxu0 0
    %1856 = vmatprep.subr.bf16.mxu0 0
    %1857 = vmatpush1.bf16.msra.mxu0 0
    %1858 = vmatprep.subr.bf16.mxu0 0
    %1859 = vmatpush1.bf16.msra.mxu0 0
    %1860 = vmatprep.subr.bf16.mxu0 0
    %1861 = vmatpush1.bf16.msra.mxu0 0
    %1862 = vmatprep.subr.bf16.mxu0 0
    %1863 = vmatpush1.bf16.msra.mxu0 0
    %1864 = vmatprep.subr.bf16.mxu0 0
    %1865 = vmatpush1.bf16.msra.mxu0 0
    %1866 = vmatprep.subr.bf16.mxu0 0
    %1867 = vmatpush1.bf16.msra.mxu0 0
    %1868 = vmatprep.subr.bf16.mxu0 0
    %1869 = vmatpush1.bf16.msra.mxu0 0
    %1870 = vmatprep.subr.bf16.mxu0 0
    %1871 = vmatpush1.bf16.msra.mxu0 0
    %1872 = vmatprep.mubr.bf16.mxu0 0
    %1873 = vmatmul.mubr.bf16.gmra.mrb[0].mxu0 %v1838
    %v1874 = vpop.f32.mrb[0].mxu0
    %v1875 = vadd.f32 0.0, %v1874
    %v1876 = vpop.f32.mrb[0].mxu0
    %v1877 = vpop.f32.mrb[0].mxu0
    %v1878 = vpop.f32.mrb[0].mxu0
    %1879 = vdwg.mxu0
    %v1880 = vadd.f32 %v1293, %v1875
    %v1881 = vxor.u32 %v1880, 2147483648
    %v1882 = vmul.f32 %v1881, 1.442695
    %v1883 = vpow.pop %v1882
    %v1884 = vadd.f32 %v1883, 1.0
    %v1885 = vrcp.pop %v1884
    %v1886 = vmul.f32 1.0, %v1885
    %v1887 = vtanh.pop %v1880
    %v1888 = vmul.f32 %v1886, %v1821
    %1890 = vrot.lane.b32.xlu0 %v1887, 64
    %v1891 = vpop.permute.xlu0 %1890
    %v1893 = vmul.f32 %v1886, %v1891
    %1895 = vrot.lane.b32.xlu0 %v1893, 32
    %v1896 = vpop.permute.xlu0 %1895
    %v1898 = vadd.f32 %v1888, %v1896
    %v1899 = vtanh.pop %v1898
    %1901 = vrot.lane.b32.xlu0 %v1899, 64
    %v1902 = vpop.permute.xlu0 %1901
    %v1904 = vmul.f32 %v1886, %v1902
    %1905 = vst.msk [vmem:[#allocation2 + $0x8] sm:$0xff] %vm1600, %v1904
    %v1906 = vld [vmem:[#allocation2] sm:$0xff]
    %v1907 = vld [vmem:[#allocation2 + $0x8] sm:$0xff]
    %v1908 = vld [vmem:[%s11] sm:$0xff]
    %v1909 = vld [vmem:[%s11 + $0x8] sm:$0xff]
    %v1910 = vld [vmem:[%s11 + $0x10] sm:$0xff]
    %v1911 = vld [vmem:[%s11 + $0x18] sm:$0xff]
    %v1912 = vld [vmem:[%s11 + $0x20] sm:$0xff]
    %v1913 = vld [vmem:[%s11 + $0x28] sm:$0xff]
    %v1914 = vld [vmem:[%s11 + $0x30] sm:$0xff]
    %v1915 = vld [vmem:[%s11 + $0x38] sm:$0xff]
    %v1916 = vld [vmem:[%s11 + $0x40] sm:$0xff]
    %v1917 = vld [vmem:[%s11 + $0x48] sm:$0xff]
    %v1918 = vld [vmem:[%s11 + $0x50] sm:$0xff]
    %v1919 = vld [vmem:[%s11 + $0x58] sm:$0xff]
    %v1920 = vld [vmem:[%s11 + $0x60] sm:$0xff]
    %v1921 = vld [vmem:[%s11 + $0x68] sm:$0xff]
    %v1922 = vld [vmem:[%s11 + $0x70] sm:$0xff]
    %v1923 = vld [vmem:[%s11 + $0x78] sm:$0xff]
    %v1924 = vld [vmem:[%s11 + $0x80] sm:$0xff]
    %v1925 = vld [vmem:[%s11 + $0x88] sm:$0xff]
    %v1926 = vld [vmem:[%s11 + $0x90] sm:$0xff]
    %v1927 = vld [vmem:[%s11 + $0x98] sm:$0xff]
    %v1928 = vld [vmem:[%s11 + $0xa0] sm:$0xff]
    %v1929 = vld [vmem:[%s11 + $0xa8] sm:$0xff]
    %v1930 = vld [vmem:[%s11 + $0xb0] sm:$0xff]
    %v1931 = vld [vmem:[%s11 + $0xb8] sm:$0xff]
    %v1932 = vld [vmem:[%s11 + $0xc0] sm:$0xff]
    %v1933 = vld [vmem:[%s11 + $0xc8] sm:$0xff]
    %v1934 = vld [vmem:[%s11 + $0xd0] sm:$0xff]
    %v1935 = vld [vmem:[%s11 + $0xd8] sm:$0xff]
    %v1936 = vld [vmem:[%s11 + $0xe0] sm:$0xff]
    %v1937 = vld [vmem:[%s11 + $0xe8] sm:$0xff]
    %v1938 = vld [vmem:[%s11 + $0xf0] sm:$0xff]
    %v1939 = vld [vmem:[%s11 + $0xf8] sm:$0xff]
    %v1940 = vld [vmem:[%s12] sm:$0x1]
    %v1942 = vlaneseq
    %v1943 = vshrl.u32 %v1942, 7
    %v1944 = vsub.s32 0, %v1943
    %v1945 = vrot.slane %v1940, %v1944
    %1947 = vmatprep.subr.mxu0 0.0
    %1948 = vmatpush1.msra.mxu0 %v1908
    %1949 = vmatprep.subr.mxu0 0.0
    %1950 = vmatpush1.msra.mxu0 %v1909
    %1951 = vmatprep.subr.mxu0 0.0
    %1952 = vmatpush1.msra.mxu0 %v1910
    %1953 = vmatprep.subr.mxu0 0.0
    %1954 = vmatpush1.msra.mxu0 %v1911
    %1955 = vmatprep.subr.mxu0 0.0
    %1956 = vmatpush1.msra.mxu0 %v1912
    %1957 = vmatprep.subr.mxu0 0.0
    %1958 = vmatpush1.msra.mxu0 %v1913
    %1959 = vmatprep.subr.mxu0 0.0
    %1960 = vmatpush1.msra.mxu0 %v1914
    %1961 = vmatprep.subr.mxu0 0.0
    %1962 = vmatpush1.msra.mxu0 %v1915
    %1963 = vmatprep.subr.mxu0 0.0
    %1964 = vmatpush1.msra.mxu0 %v1916
    %1965 = vmatprep.subr.mxu0 0.0
    %1966 = vmatpush1.msra.mxu0 %v1917
    %1967 = vmatprep.subr.mxu0 0.0
    %1968 = vmatpush1.msra.mxu0 %v1918
    %1969 = vmatprep.subr.mxu0 0.0
    %1970 = vmatpush1.msra.mxu0 %v1919
    %1971 = vmatprep.subr.mxu0 0.0
    %1972 = vmatpush1.msra.mxu0 %v1920
    %1973 = vmatprep.subr.mxu0 0.0
    %1974 = vmatpush1.msra.mxu0 %v1921
    %1975 = vmatprep.subr.mxu0 0.0
    %1976 = vmatpush1.msra.mxu0 %v1922
    %1977 = vmatprep.subr.mxu0 0.0
    %1978 = vmatpush1.msra.mxu0 %v1923
    %1979 = vmatprep.subr.mxu0 0.0
    %1980 = vmatpush1.msra.mxu0 %v1924
    %1981 = vmatprep.subr.mxu0 0.0
    %1982 = vmatpush1.msra.mxu0 %v1925
    %1983 = vmatprep.subr.mxu0 0.0
    %1984 = vmatpush1.msra.mxu0 %v1926
    %1985 = vmatprep.subr.mxu0 0.0
    %1986 = vmatpush1.msra.mxu0 %v1927
    %1987 = vmatprep.subr.mxu0 0.0
    %1988 = vmatpush1.msra.mxu0 %v1928
    %1989 = vmatprep.subr.mxu0 0.0
    %1990 = vmatpush1.msra.mxu0 %v1929
    %1991 = vmatprep.subr.mxu0 0.0
    %1992 = vmatpush1.msra.mxu0 %v1930
    %1993 = vmatprep.subr.mxu0 0.0
    %1994 = vmatpush1.msra.mxu0 %v1931
    %1995 = vmatprep.subr.mxu0 0.0
    %1996 = vmatpush1.msra.mxu0 %v1932
    %1997 = vmatprep.subr.mxu0 0.0
    %1998 = vmatpush1.msra.mxu0 %v1933
    %1999 = vmatprep.subr.mxu0 0.0
    %2000 = vmatpush1.msra.mxu0 %v1934
    %2001 = vmatprep.subr.mxu0 0.0
    %2002 = vmatpush1.msra.mxu0 %v1935
    %2003 = vmatprep.subr.mxu0 0.0
    %2004 = vmatpush1.msra.mxu0 %v1936
    %2005 = vmatprep.subr.mxu0 0.0
    %2006 = vmatpush1.msra.mxu0 %v1937
    %2007 = vmatprep.subr.mxu0 0.0
    %2008 = vmatpush1.msra.mxu0 %v1938
    %2009 = vmatprep.subr.mxu0 0.0
    %2010 = vmatpush1.msra.mxu0 %v1939
    %2011 = vmatprep.mubr.f32.mxu0 %v1907
    %2012 = vmatmul.mubr.f32.gmra.mrb[0].mxu0 %v1906
    %v2013 = vpop.f32.mrb[0].mxu0
    %v2014 = vadd.f32 %v1945, %v2013
    %v2015 = vpop.f32.mrb[0].mxu0
    %2016 = vdwg.mxu0
    %2017 = vrot.lane.b32.xlu0 %v1127, 32
    %v2018 = vpop.permute.xlu0 %2017
    %v2020 = vsel %vm170, %v2014, %v2018
    %vm2021 = vcmask 392192
    %v2022 = vsel %vm2021, %v2020, 0.0
    %2023 = vst [vmem:[#allocation11] sm:$0xff] %v2022
    // Predicated region
    $region70: #{tpu_custom_call.1} parent=1 // pred_check
      _
    $region71: #{tpu_custom_call.1} parent=1 // pred_check_branch
      %2025 = sbr.rel (0) target = $region73
    $region72: #{tpu_custom_call.1} parent=1 // pred_region
      %s2027 = ssub.s32 128, 128
      %2028 = vsyncadd [#allocation5], %s2027
      %s2030 = sshll.u32 [#allocation11], 4
      %s2031 = int_to_ptr.vmem [resolvable:$true] %s2030
      %2033 = dma.vmem_to_hbm [thread:$0]  %s2031, 128, %s13, [#allocation5]
    $region73: #{tpu_custom_call.1} parent=1 // pred_fallthru
      _
    // Predicated region
    $region74: #{tpu_custom_call.1} parent=1 // pred_check
      _
    $region75: #{tpu_custom_call.1} parent=1 // pred_check_branch
      %2035 = sbr.rel (0) target = $region77
    $region76: #{tpu_custom_call.1} parent=1 // pred_region
      %2036 = dma.done [#allocation5], 128
    $region77: #{tpu_custom_call.1} parent=1 // pred_fallthru
      _
    %2037 = vsyncpa [#allocation4], 1
    %2038 = vsyncpa [#allocation7], 1
    %2039 = vsyncpa [#allocation10], 1
    %2040 = vsyncpa [#allocation5], 1

</llo_original>
